<compile_context>
chip_gen: v7x
topology: tpu7x:2x2x1
jax: 0.10.0
libtpu: 0.0.40
codegen_flags: <defaults>
</compile_context>

<pallas_src>
import functools

import numpy as np
import jax
import jax.numpy as jnp
from jax.experimental import pallas as pl
from jax.experimental.pallas import tpu as pltpu

LANE = 128       # vreg lane width
SUBLANE = 8      # f32 sublane height
PANEL_NODES = 128  # nodes per panel (multiple of 128; 256 fills the v6e/v7x MXU better)


# ----------------------------- Pallas kernel --------------------------------

def _gcn_fused_kernel(h_pad, c_pad,
                      a_ref, x_ref, p_ref,
                      w1_ref, w2_ref, w3_ref, wl_ref, b_ref,
                      o_ref):
    """One grid step = full fused forward for one panel of graphs.

    3x (A_hat @ (H @ W) + b [+ReLU]) -> mean-pool matmul -> Linear.
    Matmul operands are bf16, accumulation and epilogue are f32.
    """
    f32, bf16 = jnp.float32, jnp.bfloat16

    a = a_ref[...]                                        # (TN, TN) bf16, reused 3x

    # Real nodes always carry a (normalized) self loop, so A_hat row-sum > 0 marks them.
    # Masking keeps padded node rows exactly zero after each bias add.
    valid = jnp.sum(a.astype(f32), axis=1, keepdims=True) > 0.0       # (TN, 1)

    b1 = b_ref[0:1, :h_pad]
    b2 = b_ref[1:2, :h_pad]
    b3 = b_ref[2:3, :h_pad]
    bl = b_ref[3:4, :c_pad]

    # conv1 + ReLU   (dropout p=0.5 is eval-mode identity)
    h = jnp.dot(x_ref[...], w1_ref[...], preferred_element_type=f32)
    h = jnp.dot(a, h.astype(bf16), preferred_element_type=f32)
    h = jnp.where(valid, jnp.maximum(h + b1, 0.0), 0.0)

    # conv2 + ReLU   (dropout p=0.5 is eval-mode identity)
    h = jnp.dot(h.astype(bf16), w2_ref[...], preferred_element_type=f32)
    h = jnp.dot(a, h.astype(bf16), preferred_element_type=f32)
    h = jnp.where(valid, jnp.maximum(h + b2, 0.0), 0.0)

    # conv3 (no ReLU)
    h = jnp.dot(h.astype(bf16), w3_ref[...], preferred_element_type=f32)
    h = jnp.dot(a, h.astype(bf16), preferred_element_type=f32)
    h = jnp.where(valid, h + b3, 0.0)

    # global_mean_pool (matmul with averaging matrix) + dropout(eval) + Linear
    pooled = jnp.dot(p_ref[...], h.astype(bf16), preferred_element_type=f32)   # (TG, Hp)
    out = jnp.dot(pooled.astype(bf16), wl_ref[...], preferred_element_type=f32) + bl
    o_ref[...] = out.astype(o_ref.dtype)                   # full (8,128) lane-dense store


def gcn_forward_fused(a_blocks, x_blocks, pool_blocks, w1, w2, w3, wl, bias):
    """Single fused pallas_call; grid = panels (independent -> 'parallel')."""
    num_panels, tn, _ = a_blocks.shape
    tg = pool_blocks.shape[1]
    f_pad = x_blocks.shape[-1]
    h_pad = w1.shape[-1]
    c_pad = wl.shape[-1]
    kernel = functools.partial(_gcn_fused_kernel, h_pad, c_pad)
    # NOTE: at large panel sizes raise pltpu.CompilerParams(vmem_limit_bytes=...) —
    # unnecessary at these shapes (everything is a handful of (8,128)/(128,128) tiles).
    return pl.pallas_call(
        kernel,
        out_shape=jax.ShapeDtypeStruct((num_panels, tg, c_pad), jnp.float32),
        grid=(num_panels,),
        in_specs=[
            pl.BlockSpec((None, tn, tn), lambda i: (i, 0, 0)),      # A_hat panel (pipelined)
            pl.BlockSpec((None, tn, f_pad), lambda i: (i, 0, 0)),   # X panel
            pl.BlockSpec((None, tg, tn), lambda i: (i, 0, 0)),      # mean-pool panel
            pl.BlockSpec((f_pad, h_pad), lambda i: (0, 0)),         # W1 (resident)
            pl.BlockSpec((h_pad, h_pad), lambda i: (0, 0)),         # W2 (resident)
            pl.BlockSpec((h_pad, h_pad), lambda i: (0, 0)),         # W3 (resident)
            pl.BlockSpec((h_pad, c_pad), lambda i: (0, 0)),         # W_lin (resident)
            pl.BlockSpec((SUBLANE, bias.shape[1]), lambda i: (0, 0)),  # packed biases
        ],
        out_specs=pl.BlockSpec((None, tg, c_pad), lambda i: (i, 0, 0)),
        compiler_params=pltpu.CompilerParams(
            dimension_semantics=("parallel",)),          # both v7x TCs; free on v5e/v6e
    )(a_blocks, x_blocks, pool_blocks, w1, w2, w3, wl, bias)


# ----------------- graph -> panel operators (one-time precompute) ------------

def _round_up(v, m):
    return ((v + m - 1) // m) * m


def _pad_to(x, shape):
    out = jnp.zeros(shape, x.dtype)
    return out.at[tuple(slice(0, s) for s in x.shape)].set(x)


def build_panel_operators(edge_index, batch, x, num_nodes, num_graphs,
                          *, panel_nodes=PANEL_NODES, graphs_per_panel=SUBLANE):
    """Pack graphs into independent node panels (block-diagonal A_hat).

    Returns bf16 per-panel operators:
      A_blocks (P, TN, TN)   D^{-1/2}(A+I)D^{-1/2}, PyG gcn_norm semantics
      X_blocks (P, TN, Fp)   node features scattered into panel-local rows
      P_blocks (P, TG, TN)   mean-pool matrix (1/|graph| entries)
    plus (graph_panel, graph_slot) index arrays to gather per-graph logits.
    Zero padding is exact: padded rows/cols of A_hat and P are zero.
    """
    batch_np = np.asarray(batch)
    src_np = np.asarray(edge_index[0])
    dst_np = np.asarray(edge_index[1])
    sizes = np.bincount(batch_np, minlength=num_graphs)

    tg = _round_up(graphs_per_panel, SUBLANE)

    # greedy assignment of whole graphs to panels (graphs never split across panels)
    graph_panel = np.zeros(num_graphs, np.int32)
    graph_slot = np.zeros(num_graphs, np.int32)
    graph_off = np.zeros(num_graphs, np.int32)
    pnl, used_nodes, used_slots = 0, 0, 0
    for g in range(num_graphs):
        s = int(sizes[g])
        assert s <= panel_nodes, "graph larger than a panel"
        if used_nodes + s > panel_nodes or used_slots >= graphs_per_panel:
            pnl += 1
            used_nodes, used_slots = 0, 0
        graph_panel[g] = pnl
        graph_slot[g] = used_slots
        graph_off[g] = used_nodes
        used_nodes += s
        used_slots += 1
    num_panels = pnl + 1

    node_panel = np.zeros(num_nodes, np.int32)
    node_local = np.zeros(num_nodes, np.int32)
    nxt = graph_off.copy()
    for n in range(num_nodes):
        g = int(batch_np[n])
        node_panel[n] = graph_panel[g]
        node_local[n] = nxt[g]
        nxt[g] += 1

    # edges never cross panels (they never cross graphs)
    assert np.all(node_panel[src_np] == node_panel[dst_np])

    # per-panel normalized adjacency, matching PyG gcn_norm:
    #  - messages flow src -> dst  =>  A[dst, src] += 1
    #  - duplicate edges scatter-ADD
    #  - explicit self loops dropped, then re-added with weight 1
    a_blk = np.zeros((num_panels, panel_nodes, panel_nodes), np.float32)
    w = (src_np != dst_np).astype(np.float32)
    np.add.at(a_blk, (node_panel[dst_np], node_local[dst_np], node_local[src_np]), w)
    a_blk[node_panel, node_local, node_local] += 1.0
    deg = a_blk.sum(axis=2)
    dinv = np.where(deg > 0, 1.0 / np.sqrt(deg), 0.0)
    a_blk = a_blk * dinv[:, :, None] * dinv[:, None, :]

    # node features, feature dim padded to lane width
    f_pad = _round_up(x.shape[1], LANE)
    x_blk = np.zeros((num_panels, panel_nodes, f_pad), np.float32)
    x_blk[node_panel, node_local, : x.shape[1]] = np.asarray(x)

    # mean-pool matrix: P[panel, slot, local] = 1/|graph|
    p_blk = np.zeros((num_panels, tg, panel_nodes), np.float32)
    p_blk[node_panel, graph_slot[batch_np], node_local] = 1.0 / sizes[batch_np]

    return (jnp.asarray(a_blk, jnp.bfloat16),
            jnp.asarray(x_blk, jnp.bfloat16),
            jnp.asarray(p_blk, jnp.bfloat16),
            jnp.asarray(graph_panel), jnp.asarray(graph_slot))


# ------------------------------- parameters ---------------------------------

def init_params(key, num_node_features, hidden_channels, num_classes):
    ks = jax.random.split(key, 8)

    def glorot(k, fan_in, fan_out):
        lim = jnp.sqrt(6.0 / (fan_in + fan_out))
        return jax.random.uniform(k, (fan_in, fan_out), jnp.float32, -lim, lim)

    return {
        "conv1_w": glorot(ks[0], num_node_features, hidden_channels),
        "conv1_b": jnp.zeros((hidden_channels,), jnp.float32),
        "conv2_w": glorot(ks[1], hidden_channels, hidden_channels),
        "conv2_b": jnp.zeros((hidden_channels,), jnp.float32),
        "conv3_w": glorot(ks[2], hidden_channels, hidden_channels),
        "conv3_b": jnp.zeros((hidden_channels,), jnp.float32),
        "lin_w": glorot(ks[3], hidden_channels, num_classes),
        "lin_b": jax.random.uniform(
            ks[4], (num_classes,), jnp.float32,
            -1.0 / jnp.sqrt(hidden_channels), 1.0 / jnp.sqrt(hidden_channels)),
    }


def pad_and_pack_params(params, num_node_features, hidden_channels, num_classes):
    """Weights -> bf16, lane dims padded to 128; biases packed into one (8,128) f32 slab."""
    f_pad = _round_up(num_node_features, LANE)
    h_pad = _round_up(hidden_channels, LANE)
    c_pad = _round_up(num_classes, LANE)
    b_pad = max(h_pad, c_pad)

    bias = jnp.zeros((SUBLANE, b_pad), jnp.float32)
    bias = bias.at[0, :hidden_channels].set(params["conv1_b"])
    bias = bias.at[1, :hidden_channels].set(params["conv2_b"])
    bias = bias.at[2, :hidden_channels].set(params["conv3_b"])
    bias = bias.at[3, :num_classes].set(params["lin_b"])

    def wpad(w, r, c):
        return _pad_to(w, (r, c)).astype(jnp.bfloat16)

    return {
        "w1": wpad(params["conv1_w"], f_pad, h_pad),
        "w2": wpad(params["conv2_w"], h_pad, h_pad),
        "w3": wpad(params["conv3_w"], h_pad, h_pad),
        "wl": wpad(params["lin_w"], h_pad, c_pad),
        "bias": bias,
    }


# --------------------------- pure-JAX f32 reference --------------------------

def normalized_adjacency(edge_index, num_nodes):
    src, dst = edge_index[0], edge_index[1]
    w = jnp.where(src == dst, 0.0, 1.0)
    a = jnp.zeros((num_nodes, num_nodes), jnp.float32).at[dst, src].add(w)
    a = a + jnp.eye(num_nodes, dtype=jnp.float32)
    deg = a.sum(axis=1)
    dinv = jnp.where(deg > 0, jax.lax.rsqrt(deg), 0.0)
    return a * dinv[:, None] * dinv[None, :]


def mean_pool_matrix(batch, num_graphs, num_nodes):
    onehot = (batch[None, :] == jnp.arange(num_graphs)[:, None]).astype(jnp.float32)
    counts = onehot.sum(axis=1, keepdims=True)
    return onehot / jnp.maximum(counts, 1.0)


def gcn_reference(x, edge_index, batch, params, num_graphs):
    n = x.shape[0]
    a = normalized_adjacency(edge_index, n)
    h = jnp.maximum(a @ (x @ params["conv1_w"]) + params["conv1_b"], 0.0)
    h = jnp.maximum(a @ (h @ params["conv2_w"]) + params["conv2_b"], 0.0)
    h = a @ (h @ params["conv3_w"]) + params["conv3_b"]
    pool = mean_pool_matrix(batch, num_graphs, n)
    return (pool @ h) @ params["lin_w"] + params["lin_b"]


# ----------------------------------- main ------------------------------------

if __name__ == "__main__":
    key = jax.random.PRNGKey(0)
    k_x, k_e, k_p = jax.random.split(key, 3)

    num_node_features = 8
    hidden_channels = 32
    num_classes = 4
    nodes_per_graph = 8
    num_graphs = 4
    num_nodes = num_graphs * nodes_per_graph
    edges_per_graph = 12

    # deterministic random node features
    x = jax.random.normal(k_x, (num_nodes, num_node_features), jnp.float32)

    # deterministic random edges, kept within each graph's node range, made undirected
    srcs, dsts = [], []
    for g in range(num_graphs):
        lo = g * nodes_per_graph
        s = jax.random.randint(jax.random.fold_in(k_e, 2 * g), (edges_per_graph,),
                               lo, lo + nodes_per_graph)
        d = jax.random.randint(jax.random.fold_in(k_e, 2 * g + 1), (edges_per_graph,),
                               lo, lo + nodes_per_graph)
        srcs.append(s)
        dsts.append(d)
    src = jnp.concatenate(srcs)
    dst = jnp.concatenate(dsts)
    edge_index = jnp.stack([jnp.concatenate([src, dst]),
                            jnp.concatenate([dst, src])], axis=0).astype(jnp.int32)

    batch = jnp.repeat(jnp.arange(num_graphs, dtype=jnp.int32), nodes_per_graph)

    # --- one-time precompute: panel operators (static graph) + padded bf16 params ---
    # graphs_per_panel=2 here so the demo exercises a 2-step "parallel" grid.
    a_blocks, x_blocks, p_blocks, graph_panel, graph_slot = build_panel_operators(
        edge_index, batch, x, num_nodes, num_graphs,
        panel_nodes=PANEL_NODES, graphs_per_panel=2)

    params = init_params(k_p, num_node_features, hidden_channels, num_classes)
    pp = pad_and_pack_params(params, num_node_features, hidden_channels, num_classes)

    forward = jax.jit(gcn_forward_fused)
    out_pad = forward(a_blocks, x_blocks, p_blocks,
                      pp["w1"], pp["w2"], pp["w3"], pp["wl"], pp["bias"])
    out_pad = jax.block_until_ready(out_pad)

    logits = out_pad[graph_panel, graph_slot, :num_classes]

    # checks: shape, finiteness, and agreement with a pure-JAX f32 reference
    ref = gcn_reference(x, edge_index, batch, params, num_graphs)
    assert logits.shape == (num_graphs, num_classes)
    assert jnp.all(jnp.isfinite(logits))
    max_err = float(jnp.max(jnp.abs(logits - ref)))
    assert max_err < 5e-2, f"max abs err vs reference: {max_err}"
    print("KERNEL_OK")
</pallas_src>

<mosaic_0001>
module attributes {stable_mosaic.version = 11 : i64} {
  func.func @_gcn_fused_kernel(%arg0: i32, %arg1: memref<1x128x128xbf16, #tpu.memory_space<vmem>>, %arg2: memref<1x128x128xbf16, #tpu.memory_space<vmem>>, %arg3: memref<1x8x128xbf16, #tpu.memory_space<vmem>>, %arg4: memref<128x128xbf16, #tpu.memory_space<vmem>>, %arg5: memref<128x128xbf16, #tpu.memory_space<vmem>>, %arg6: memref<128x128xbf16, #tpu.memory_space<vmem>>, %arg7: memref<128x128xbf16, #tpu.memory_space<vmem>>, %arg8: memref<8x128xf32, #tpu.memory_space<vmem>>, %arg9: memref<1x8x128xf32, #tpu.memory_space<vmem>>) attributes {dimension_semantics = [#tpu.dimension_semantics<parallel>], iteration_bounds = array<i64: 2>, scalar_prefetch = 0 : i64, scratch_operands = 0 : i64, tpu.core_type = #tpu.core_type<tc>, window_params = [{transform_indices = @transform_0, window_bounds = array<i64: 1, 128, 128>}, {transform_indices = @transform_1, window_bounds = array<i64: 1, 128, 128>}, {transform_indices = @transform_2, window_bounds = array<i64: 1, 8, 128>}, {pipeline_mode = #tpu.pipeline_mode<synchronous>, transform_indices = @transform_3, window_bounds = array<i64: 128, 128>}, {pipeline_mode = #tpu.pipeline_mode<synchronous>, transform_indices = @transform_4, window_bounds = array<i64: 128, 128>}, {pipeline_mode = #tpu.pipeline_mode<synchronous>, transform_indices = @transform_5, window_bounds = array<i64: 128, 128>}, {pipeline_mode = #tpu.pipeline_mode<synchronous>, transform_indices = @transform_6, window_bounds = array<i64: 128, 128>}, {pipeline_mode = #tpu.pipeline_mode<synchronous>, transform_indices = @transform_7, window_bounds = array<i64: 8, 128>}, {transform_indices = @transform_8, window_bounds = array<i64: 1, 8, 128>}]} {
    %c0 = arith.constant 0 : index
    %c0_0 = arith.constant 0 : index
    %c0_1 = arith.constant 0 : index
    %0 = vector.load %arg1[%c0, %c0_0, %c0_1] : memref<1x128x128xbf16, #tpu.memory_space<vmem>>, vector<1x128x128xbf16>
    %1 = vector.shape_cast %0 : vector<1x128x128xbf16> to vector<128x128xbf16>
    %2 = arith.extf %1 : vector<128x128xbf16> to vector<128x128xf32>
    %cst = arith.constant dense<0.000000e+00> : vector<128xf32>
    %3 = vector.multi_reduction <add>, %2, %cst [1] : vector<128x128xf32> to vector<128xf32>
    %4 = vector.shape_cast %3 : vector<128xf32> to vector<128x1xf32>
    %cst_2 = arith.constant 0.000000e+00 : f32
    %5 = vector.broadcast %cst_2 : f32 to vector<128x1xf32>
    %6 = arith.cmpf ogt, %4, %5 : vector<128x1xf32>
    %c0_3 = arith.constant 0 : index
    %c0_4 = arith.constant 0 : index
    %7 = vector.load %arg8[%c0_3, %c0_4] : memref<8x128xf32, #tpu.memory_space<vmem>>, vector<1x128xf32>
    %c1 = arith.constant 1 : index
    %c0_5 = arith.constant 0 : index
    %8 = vector.load %arg8[%c1, %c0_5] : memref<8x128xf32, #tpu.memory_space<vmem>>, vector<1x128xf32>
    %c2 = arith.constant 2 : index
    %c0_6 = arith.constant 0 : index
    %9 = vector.load %arg8[%c2, %c0_6] : memref<8x128xf32, #tpu.memory_space<vmem>>, vector<1x128xf32>
    %c3 = arith.constant 3 : index
    %c0_7 = arith.constant 0 : index
    %10 = vector.load %arg8[%c3, %c0_7] : memref<8x128xf32, #tpu.memory_space<vmem>>, vector<1x128xf32>
    %c0_8 = arith.constant 0 : index
    %c0_9 = arith.constant 0 : index
    %c0_10 = arith.constant 0 : index
    %11 = vector.load %arg2[%c0_8, %c0_9, %c0_10] : memref<1x128x128xbf16, #tpu.memory_space<vmem>>, vector<1x128x128xbf16>
    %12 = vector.shape_cast %11 : vector<1x128x128xbf16> to vector<128x128xbf16>
    %c0_11 = arith.constant 0 : index
    %c0_12 = arith.constant 0 : index
    %13 = vector.load %arg4[%c0_11, %c0_12] : memref<128x128xbf16, #tpu.memory_space<vmem>>, vector<128x128xbf16>
    %cst_13 = arith.constant dense<0.000000e+00> : vector<128x128xf32>
    %14 = tpu.matmul %12, %13, %cst_13 {dimension_numbers = #tpu.dot_dimension_numbers<[1], [0], [0], [1], [0, 0, 1, 1], [], []>} : vector<128x128xbf16>, vector<128x128xbf16>, vector<128x128xf32> -> vector<128x128xf32>
    %15 = arith.truncf %14 : vector<128x128xf32> to vector<128x128xbf16>
    %cst_14 = arith.constant dense<0.000000e+00> : vector<128x128xf32>
    %16 = tpu.matmul %1, %15, %cst_14 {dimension_numbers = #tpu.dot_dimension_numbers<[1], [0], [0], [1], [0, 0, 1, 1], [], []>} : vector<128x128xbf16>, vector<128x128xbf16>, vector<128x128xf32> -> vector<128x128xf32>
    %17 = vector.broadcast %7 : vector<1x128xf32> to vector<128x128xf32>
    %18 = arith.addf %16, %17 : vector<128x128xf32>
    %cst_15 = arith.constant 0.000000e+00 : f32
    %19 = vector.broadcast %cst_15 : f32 to vector<128x128xf32>
    %20 = arith.maximumf %18, %19 : vector<128x128xf32>
    %cst_16 = arith.constant 0.000000e+00 : f32
    %21 = vector.shape_cast %6 : vector<128x1xi1> to vector<128x1xi1>
    %22 = vector.broadcast %21 : vector<128x1xi1> to vector<128x128xi1>
    %23 = vector.broadcast %cst_16 : f32 to vector<128x128xf32>
    %24 = arith.select %22, %20, %23 : vector<128x128xi1>, vector<128x128xf32>
    %25 = arith.truncf %24 : vector<128x128xf32> to vector<128x128xbf16>
    %c0_17 = arith.constant 0 : index
    %c0_18 = arith.constant 0 : index
    %26 = vector.load %arg5[%c0_17, %c0_18] : memref<128x128xbf16, #tpu.memory_space<vmem>>, vector<128x128xbf16>
    %cst_19 = arith.constant dense<0.000000e+00> : vector<128x128xf32>
    %27 = tpu.matmul %25, %26, %cst_19 {dimension_numbers = #tpu.dot_dimension_numbers<[1], [0], [0], [1], [0, 0, 1, 1], [], []>} : vector<128x128xbf16>, vector<128x128xbf16>, vector<128x128xf32> -> vector<128x128xf32>
    %28 = arith.truncf %27 : vector<128x128xf32> to vector<128x128xbf16>
    %cst_20 = arith.constant dense<0.000000e+00> : vector<128x128xf32>
    %29 = tpu.matmul %1, %28, %cst_20 {dimension_numbers = #tpu.dot_dimension_numbers<[1], [0], [0], [1], [0, 0, 1, 1], [], []>} : vector<128x128xbf16>, vector<128x128xbf16>, vector<128x128xf32> -> vector<128x128xf32>
    %30 = vector.broadcast %8 : vector<1x128xf32> to vector<128x128xf32>
    %31 = arith.addf %29, %30 : vector<128x128xf32>
    %cst_21 = arith.constant 0.000000e+00 : f32
    %32 = vector.broadcast %cst_21 : f32 to vector<128x128xf32>
    %33 = arith.maximumf %31, %32 : vector<128x128xf32>
    %cst_22 = arith.constant 0.000000e+00 : f32
    %34 = vector.shape_cast %6 : vector<128x1xi1> to vector<128x1xi1>
    %35 = vector.broadcast %34 : vector<128x1xi1> to vector<128x128xi1>
    %36 = vector.broadcast %cst_22 : f32 to vector<128x128xf32>
    %37 = arith.select %35, %33, %36 : vector<128x128xi1>, vector<128x128xf32>
    %38 = arith.truncf %37 : vector<128x128xf32> to vector<128x128xbf16>
    %c0_23 = arith.constant 0 : index
    %c0_24 = arith.constant 0 : index
    %39 = vector.load %arg6[%c0_23, %c0_24] : memref<128x128xbf16, #tpu.memory_space<vmem>>, vector<128x128xbf16>
    %cst_25 = arith.constant dense<0.000000e+00> : vector<128x128xf32>
    %40 = tpu.matmul %38, %39, %cst_25 {dimension_numbers = #tpu.dot_dimension_numbers<[1], [0], [0], [1], [0, 0, 1, 1], [], []>} : vector<128x128xbf16>, vector<128x128xbf16>, vector<128x128xf32> -> vector<128x128xf32>
    %41 = arith.truncf %40 : vector<128x128xf32> to vector<128x128xbf16>
    %cst_26 = arith.constant dense<0.000000e+00> : vector<128x128xf32>
    %42 = tpu.matmul %1, %41, %cst_26 {dimension_numbers = #tpu.dot_dimension_numbers<[1], [0], [0], [1], [0, 0, 1, 1], [], []>} : vector<128x128xbf16>, vector<128x128xbf16>, vector<128x128xf32> -> vector<128x128xf32>
    %43 = vector.broadcast %9 : vector<1x128xf32> to vector<128x128xf32>
    %44 = arith.addf %42, %43 : vector<128x128xf32>
    %cst_27 = arith.constant 0.000000e+00 : f32
    %45 = vector.shape_cast %6 : vector<128x1xi1> to vector<128x1xi1>
    %46 = vector.broadcast %45 : vector<128x1xi1> to vector<128x128xi1>
    %47 = vector.broadcast %cst_27 : f32 to vector<128x128xf32>
    %48 = arith.select %46, %44, %47 : vector<128x128xi1>, vector<128x128xf32>
    %c0_28 = arith.constant 0 : index
    %c0_29 = arith.constant 0 : index
    %c0_30 = arith.constant 0 : index
    %49 = vector.load %arg3[%c0_28, %c0_29, %c0_30] : memref<1x8x128xbf16, #tpu.memory_space<vmem>>, vector<1x8x128xbf16>
    %50 = vector.shape_cast %49 : vector<1x8x128xbf16> to vector<8x128xbf16>
    %51 = arith.truncf %48 : vector<128x128xf32> to vector<128x128xbf16>
    %cst_31 = arith.constant dense<0.000000e+00> : vector<8x128xf32>
    %52 = tpu.matmul %50, %51, %cst_31 {dimension_numbers = #tpu.dot_dimension_numbers<[1], [0], [0], [1], [0, 0, 1, 1], [], []>} : vector<8x128xbf16>, vector<128x128xbf16>, vector<8x128xf32> -> vector<8x128xf32>
    %53 = arith.truncf %52 : vector<8x128xf32> to vector<8x128xbf16>
    %c0_32 = arith.constant 0 : index
    %c0_33 = arith.constant 0 : index
    %54 = vector.load %arg7[%c0_32, %c0_33] : memref<128x128xbf16, #tpu.memory_space<vmem>>, vector<128x128xbf16>
    %cst_34 = arith.constant dense<0.000000e+00> : vector<8x128xf32>
    %55 = tpu.matmul %53, %54, %cst_34 {dimension_numbers = #tpu.dot_dimension_numbers<[1], [0], [0], [1], [0, 0, 1, 1], [], []>} : vector<8x128xbf16>, vector<128x128xbf16>, vector<8x128xf32> -> vector<8x128xf32>
    %56 = vector.broadcast %10 : vector<1x128xf32> to vector<8x128xf32>
    %57 = arith.addf %55, %56 : vector<8x128xf32>
    %c0_35 = arith.constant 0 : index
    %c0_36 = arith.constant 0 : index
    %c0_37 = arith.constant 0 : index
    %58 = vector.load %arg9[%c0_35, %c0_36, %c0_37] : memref<1x8x128xf32, #tpu.memory_space<vmem>>, vector<1x8x128xf32>
    %59 = vector.shape_cast %58 : vector<1x8x128xf32> to vector<8x128xf32>
    %60 = vector.shape_cast %57 : vector<8x128xf32> to vector<1x8x128xf32>
    tpu.vector_store %arg9[%c0_35, %c0_36, %c0_37], %60 {strides = array<i32>} : memref<1x8x128xf32, #tpu.memory_space<vmem>>, vector<1x8x128xf32>,
    return
  }
  func.func @transform_0(%arg0: i32) -> (i32, i32, i32) {
    %c0_i32 = arith.constant 0 : i32
    %c0_i32_0 = arith.constant 0 : i32
    %c0_i32_1 = arith.constant 0 : i32
    return %arg0, %c0_i32, %c0_i32_0 : i32, i32, i32
  }
  func.func @transform_1(%arg0: i32) -> (i32, i32, i32) {
    %c0_i32 = arith.constant 0 : i32
    %c0_i32_0 = arith.constant 0 : i32
    %c0_i32_1 = arith.constant 0 : i32
    return %arg0, %c0_i32, %c0_i32_0 : i32, i32, i32
  }
  func.func @transform_2(%arg0: i32) -> (i32, i32, i32) {
    %c0_i32 = arith.constant 0 : i32
    %c0_i32_0 = arith.constant 0 : i32
    %c0_i32_1 = arith.constant 0 : i32
    return %arg0, %c0_i32, %c0_i32_0 : i32, i32, i32
  }
  func.func @transform_3(%arg0: i32) -> (i32, i32) {
    %c0_i32 = arith.constant 0 : i32
    %c0_i32_0 = arith.constant 0 : i32
    %c0_i32_1 = arith.constant 0 : i32
    return %c0_i32, %c0_i32_0 : i32, i32
  }
  func.func @transform_4(%arg0: i32) -> (i32, i32) {
    %c0_i32 = arith.constant 0 : i32
    %c0_i32_0 = arith.constant 0 : i32
    %c0_i32_1 = arith.constant 0 : i32
    return %c0_i32, %c0_i32_0 : i32, i32
  }
  func.func @transform_5(%arg0: i32) -> (i32, i32) {
    %c0_i32 = arith.constant 0 : i32
    %c0_i32_0 = arith.constant 0 : i32
    %c0_i32_1 = arith.constant 0 : i32
    return %c0_i32, %c0_i32_0 : i32, i32
  }
  func.func @transform_6(%arg0: i32) -> (i32, i32) {
    %c0_i32 = arith.constant 0 : i32
    %c0_i32_0 = arith.constant 0 : i32
    %c0_i32_1 = arith.constant 0 : i32
    return %c0_i32, %c0_i32_0 : i32, i32
  }
  func.func @transform_7(%arg0: i32) -> (i32, i32) {
    %c0_i32 = arith.constant 0 : i32
    %c0_i32_0 = arith.constant 0 : i32
    %c0_i32_1 = arith.constant 0 : i32
    return %c0_i32, %c0_i32_0 : i32, i32
  }
  func.func @transform_8(%arg0: i32) -> (i32, i32, i32) {
    %c0_i32 = arith.constant 0 : i32
    %c0_i32_0 = arith.constant 0 : i32
    %c0_i32_1 = arith.constant 0 : i32
    return %arg0, %c0_i32, %c0_i32_0 : i32, i32, i32
  }
}

</mosaic_0001>

<llo_original>
// kernel: gcn_forward_fused.1
$region0: #{gcn_forward_fused.1}
  #allocation0 [shape = 'u32[]', space=smem, size = 0x4, offset = 0x4, fixed_abs, tag = 'smem constant byte address 0x4 - core index']
  #allocation1 [shape = 'u32[144,128]{1,0:T(1,128)}', space=vmem, size = 0x12000, scoped, tag = 'internal scratch']
  %s0 = inlined_call_operand.hbm [shape: bf16[2,128,128], index: 0, kind: input, shape index: {}]
  %s1 = inlined_call_operand.hbm [shape: bf16[2,128,128], index: 1, kind: input, shape index: {}]
  %s2 = inlined_call_operand.hbm [shape: bf16[2,8,128], index: 2, kind: input, shape index: {}]
  %s3 = inlined_call_operand.hbm [shape: bf16[128,128], index: 3, kind: input, shape index: {}]
  %s4 = inlined_call_operand.hbm [shape: bf16[128,128], index: 4, kind: input, shape index: {}]
  %s5 = inlined_call_operand.hbm [shape: bf16[128,128], index: 5, kind: input, shape index: {}]
  %s6 = inlined_call_operand.hbm [shape: bf16[128,128], index: 6, kind: input, shape index: {}]
  %s7 = inlined_call_operand.vmem [shape: f32[8,128], index: 7, kind: input, shape index: {}]
  %s8 = inlined_call_operand.hbm [shape: f32[2,8,128], index: 8, kind: output, shape index: {}]
  %s9 = sld [smem:[#allocation0]]
  $region93: #{gcn_forward_fused.1} parent=0
    _
  %s11 = ssub.s32 1, %s9
  %s12 = scalar_select 0, %s11, %s9
  $region1: #{gcn_forward_fused.1} parent=0
    #allocation2 [shape = 'u8[65536]{0}', space=vmem, size = 0x10000, scoped, tag = 'input window, operand 0']
    #allocation3 [shape = 's32[2]{0}', space=sflag, size = 0x8, scoped, tag = 'scoped memory for gcn_forward_fused.1']
    #allocation4 [shape = 's32[2]{0}', space=sflag, size = 0x8, scoped, tag = 'scoped memory for gcn_forward_fused.1']
    #allocation5 [shape = 'u8[65536]{0}', space=vmem, size = 0x10000, scoped, tag = 'input window, operand 1']
    #allocation6 [shape = 's32[2]{0}', space=sflag, size = 0x8, scoped, tag = 'scoped memory for gcn_forward_fused.1']
    #allocation7 [shape = 'u8[4096]{0}', space=vmem, size = 0x1000, scoped, tag = 'input window, operand 2']
    #allocation8 [shape = 'u8[32768]{0}', space=vmem, size = 0x8000, scoped, tag = 'input window, operand 3, single buffered']
    #allocation9 [shape = 's32[1]{0}', space=sflag, size = 0x4, scoped, tag = 'scoped memory for gcn_forward_fused.1']
    #allocation10 [shape = 'u8[32768]{0}', space=vmem, size = 0x8000, scoped, tag = 'input window, operand 4, single buffered']
    #allocation11 [shape = 'u8[32768]{0}', space=vmem, size = 0x8000, scoped, tag = 'input window, operand 5, single buffered']
    #allocation12 [shape = 's32[1]{0}', space=sflag, size = 0x4, scoped, tag = 'scoped memory for gcn_forward_fused.1']
    #allocation13 [shape = 'u8[32768]{0}', space=vmem, size = 0x8000, scoped, tag = 'input window, operand 6, single buffered']
    #allocation14 [shape = 'u8[8192]{0}', space=vmem, size = 0x2000, scoped, tag = 'output window, operand 0']
    %13 = vsyncpa [#allocation3], 0
    %s14 = scalar_lea.sflag [#allocation3], 1
    %15 = vsyncpa %s14, 0
    %16 = vsyncpa [#allocation6], 0
    %s17 = scalar_lea.sflag [#allocation6], 1
    %18 = vsyncpa %s17, 0
    %19 = vsyncpa [#allocation9], 0
    %20 = vsyncpa [#allocation12], 0
    %21 = vsyncpa [#allocation4], 0
    %s22 = scalar_lea.sflag [#allocation4], 1
    %23 = vsyncpa %s22, 0
    loop: start=0, step=1, limit=4
    $region2: #{gcn_forward_fused.1} parent=1 // loop_pre_header
      _
    $region3: #{gcn_forward_fused.1} parent=1 // loop_header
      %s25 = sphi 0, %s29
      %p26 = scmp.ge.s32.totalorder %s25, 4
      %s35 = sphi 0, %s37
      %s38 = sphi 0, %s35
      %s39 = sphi 0, %s38
      %s55 = sphi 0, %s39
      %s61 = sphi 0, %s63
      %s64 = sphi 0, %s61
      %s65 = sphi 0, %s64
      %s81 = sphi 0, %s65
      %s87 = sphi 0, %s89
      %s90 = sphi 0, %s87
      %s91 = sphi 0, %s90
      %s107 = sphi 0, %s91
      %s111 = sphi 0, %s111
      %s113 = sphi 0, %s111
      %s114 = sphi 0, %s113
      %s128 = sphi 0, %s114
      %s132 = sphi 0, %s132
      %s134 = sphi 0, %s132
      %s135 = sphi 0, %s134
      %s149 = sphi 0, %s135
      %s153 = sphi 0, %s153
      %s155 = sphi 0, %s153
      %s156 = sphi 0, %s155
      %s170 = sphi 0, %s156
      %s174 = sphi 0, %s174
      %s176 = sphi 0, %s174
      %s177 = sphi 0, %s176
      %s191 = sphi 0, %s177
      %s195 = sphi 0, %s195
      %s197 = sphi 0, %s195
      %s198 = sphi 0, %s197
      %s212 = sphi 0, %s198
      %s218 = sphi 0, %s220
      %s221 = sphi 0, %s218
      %s222 = sphi 0, %s221
      %s238 = sphi 0, %s222
    $region4: #{gcn_forward_fused.1} parent=1 // loop_header_branch
      %28 = sbr.rel (%p26) target = $region8
    $region5: #{gcn_forward_fused.1} parent=1 // loop_body
      %s30 = ssub.s32 %s25, 1
      %s31 = ssub.s32 %s25, 2
      %s32 = sadd.s32 %s25, 1
      %s33 = ssub.s32 %s25, %s32
      %p34 = scmp.eq.s32.totalorder %s33, 0
      %s36 = sadd.s32 %s35, 1
      %s37 = scalar_select %p34, %s35, %s36
      %p40 = pneg %p34
      %p41 = scmp.eq.s32.totalorder %s25, 1
      %p42 = por %p40, %p41
      %p43 = scmp.ne.s32.totalorder %s35, %s38
      %p44 = scmp.eq.s32.totalorder %s25, 0
      %p45 = por %p43, %p44
      %p46 = scmp.ne.s32.totalorder %s35, %s38
      %p47 = scmp.eq.s32.totalorder %s30, 1
      %p48 = por %p46, %p47
      %p49 = scmp.ne.s32.totalorder %s38, %s39
      %p50 = scmp.eq.s32.totalorder %s30, 0
      %p51 = por %p49, %p50
      %p52 = scmp.ne.s32.totalorder %s38, %s39
      %p53 = scmp.eq.s32.totalorder %s31, 1
      %p54 = por %p52, %p53
      %p56 = scmp.ne.s32.totalorder %s39, %s55
      %p57 = scmp.eq.s32.totalorder %s31, 0
      %p58 = por %p56, %p57
      %s59 = ssub.s32 %s25, %s32
      %p60 = scmp.eq.s32.totalorder %s59, 0
      %s62 = sadd.s32 %s61, 1
      %s63 = scalar_select %p60, %s61, %s62
      %p66 = pneg %p60
      %p67 = scmp.eq.s32.totalorder %s25, 1
      %p68 = por %p66, %p67
      %p69 = scmp.ne.s32.totalorder %s61, %s64
      %p70 = scmp.eq.s32.totalorder %s25, 0
      %p71 = por %p69, %p70
      %p72 = scmp.ne.s32.totalorder %s61, %s64
      %p73 = scmp.eq.s32.totalorder %s30, 1
      %p74 = por %p72, %p73
      %p75 = scmp.ne.s32.totalorder %s64, %s65
      %p76 = scmp.eq.s32.totalorder %s30, 0
      %p77 = por %p75, %p76
      %p78 = scmp.ne.s32.totalorder %s64, %s65
      %p79 = scmp.eq.s32.totalorder %s31, 1
      %p80 = por %p78, %p79
      %p82 = scmp.ne.s32.totalorder %s65, %s81
      %p83 = scmp.eq.s32.totalorder %s31, 0
      %p84 = por %p82, %p83
      %s85 = ssub.s32 %s25, %s32
      %p86 = scmp.eq.s32.totalorder %s85, 0
      %s88 = sadd.s32 %s87, 1
      %s89 = scalar_select %p86, %s87, %s88
      %p92 = pneg %p86
      %p93 = scmp.eq.s32.totalorder %s25, 1
      %p94 = por %p92, %p93
      %p95 = scmp.ne.s32.totalorder %s87, %s90
      %p96 = scmp.eq.s32.totalorder %s25, 0
      %p97 = por %p95, %p96
      %p98 = scmp.ne.s32.totalorder %s87, %s90
      %p99 = scmp.eq.s32.totalorder %s30, 1
      %p100 = por %p98, %p99
      %p101 = scmp.ne.s32.totalorder %s90, %s91
      %p102 = scmp.eq.s32.totalorder %s30, 0
      %p103 = por %p101, %p102
      %p104 = scmp.ne.s32.totalorder %s90, %s91
      %p105 = scmp.eq.s32.totalorder %s31, 1
      %p106 = por %p104, %p105
      %p108 = scmp.ne.s32.totalorder %s91, %s107
      %p109 = scmp.eq.s32.totalorder %s31, 0
      %p110 = por %p108, %p109
      %s112 = sadd.s32 %s111, 1
      %p115 = scmp.eq.s32.totalorder %s25, 1
      %p116 = scmp.ne.s32.totalorder %s111, %s113
      %p117 = scmp.eq.s32.totalorder %s25, 0
      %p118 = por %p116, %p117
      %p119 = scmp.ne.s32.totalorder %s111, %s113
      %p120 = scmp.eq.s32.totalorder %s30, 1
      %p121 = por %p119, %p120
      %p122 = scmp.ne.s32.totalorder %s113, %s114
      %p123 = scmp.eq.s32.totalorder %s30, 0
      %p124 = por %p122, %p123
      %p125 = scmp.ne.s32.totalorder %s113, %s114
      %p126 = scmp.eq.s32.totalorder %s31, 1
      %p127 = por %p125, %p126
      %p129 = scmp.ne.s32.totalorder %s114, %s128
      %p130 = scmp.eq.s32.totalorder %s31, 0
      %p131 = por %p129, %p130
      %s133 = sadd.s32 %s132, 1
      %p136 = scmp.eq.s32.totalorder %s25, 1
      %p137 = scmp.ne.s32.totalorder %s132, %s134
      %p138 = scmp.eq.s32.totalorder %s25, 0
      %p139 = por %p137, %p138
      %p140 = scmp.ne.s32.totalorder %s132, %s134
      %p141 = scmp.eq.s32.totalorder %s30, 1
      %p142 = por %p140, %p141
      %p143 = scmp.ne.s32.totalorder %s134, %s135
      %p144 = scmp.eq.s32.totalorder %s30, 0
      %p145 = por %p143, %p144
      %p146 = scmp.ne.s32.totalorder %s134, %s135
      %p147 = scmp.eq.s32.totalorder %s31, 1
      %p148 = por %p146, %p147
      %p150 = scmp.ne.s32.totalorder %s135, %s149
      %p151 = scmp.eq.s32.totalorder %s31, 0
      %p152 = por %p150, %p151
      %s154 = sadd.s32 %s153, 1
      %p157 = scmp.eq.s32.totalorder %s25, 1
      %p158 = scmp.ne.s32.totalorder %s153, %s155
      %p159 = scmp.eq.s32.totalorder %s25, 0
      %p160 = por %p158, %p159
      %p161 = scmp.ne.s32.totalorder %s153, %s155
      %p162 = scmp.eq.s32.totalorder %s30, 1
      %p163 = por %p161, %p162
      %p164 = scmp.ne.s32.totalorder %s155, %s156
      %p165 = scmp.eq.s32.totalorder %s30, 0
      %p166 = por %p164, %p165
      %p167 = scmp.ne.s32.totalorder %s155, %s156
      %p168 = scmp.eq.s32.totalorder %s31, 1
      %p169 = por %p167, %p168
      %p171 = scmp.ne.s32.totalorder %s156, %s170
      %p172 = scmp.eq.s32.totalorder %s31, 0
      %p173 = por %p171, %p172
      %s175 = sadd.s32 %s174, 1
      %p178 = scmp.eq.s32.totalorder %s25, 1
      %p179 = scmp.ne.s32.totalorder %s174, %s176
      %p180 = scmp.eq.s32.totalorder %s25, 0
      %p181 = por %p179, %p180
      %p182 = scmp.ne.s32.totalorder %s174, %s176
      %p183 = scmp.eq.s32.totalorder %s30, 1
      %p184 = por %p182, %p183
      %p185 = scmp.ne.s32.totalorder %s176, %s177
      %p186 = scmp.eq.s32.totalorder %s30, 0
      %p187 = por %p185, %p186
      %p188 = scmp.ne.s32.totalorder %s176, %s177
      %p189 = scmp.eq.s32.totalorder %s31, 1
      %p190 = por %p188, %p189
      %p192 = scmp.ne.s32.totalorder %s177, %s191
      %p193 = scmp.eq.s32.totalorder %s31, 0
      %p194 = por %p192, %p193
      %s196 = sadd.s32 %s195, 1
      %p199 = scmp.eq.s32.totalorder %s25, 1
      %p200 = scmp.ne.s32.totalorder %s195, %s197
      %p201 = scmp.eq.s32.totalorder %s25, 0
      %p202 = por %p200, %p201
      %p203 = scmp.ne.s32.totalorder %s195, %s197
      %p204 = scmp.eq.s32.totalorder %s30, 1
      %p205 = por %p203, %p204
      %p206 = scmp.ne.s32.totalorder %s197, %s198
      %p207 = scmp.eq.s32.totalorder %s30, 0
      %p208 = por %p206, %p207
      %p209 = scmp.ne.s32.totalorder %s197, %s198
      %p210 = scmp.eq.s32.totalorder %s31, 1
      %p211 = por %p209, %p210
      %p213 = scmp.ne.s32.totalorder %s198, %s212
      %p214 = scmp.eq.s32.totalorder %s31, 0
      %p215 = por %p213, %p214
      %s216 = ssub.s32 %s25, %s32
      %p217 = scmp.eq.s32.totalorder %s216, 0
      %s219 = sadd.s32 %s218, 1
      %s220 = scalar_select %p217, %s218, %s219
      %p223 = pneg %p217
      %p224 = scmp.eq.s32.totalorder %s25, 1
      %p225 = por %p223, %p224
      %p226 = scmp.ne.s32.totalorder %s218, %s221
      %p227 = scmp.eq.s32.totalorder %s25, 0
      %p228 = por %p226, %p227
      %p229 = scmp.ne.s32.totalorder %s218, %s221
      %p230 = scmp.eq.s32.totalorder %s30, 1
      %p231 = por %p229, %p230
      %p232 = scmp.ne.s32.totalorder %s221, %s222
      %p233 = scmp.eq.s32.totalorder %s30, 0
      %p234 = por %p232, %p233
      %p235 = scmp.ne.s32.totalorder %s221, %s222
      %p236 = scmp.eq.s32.totalorder %s31, 1
      %p237 = por %p235, %p236
      %p239 = scmp.ne.s32.totalorder %s222, %s238
      %p240 = scmp.eq.s32.totalorder %s31, 0
      %p241 = por %p239, %p240
      %p242 = scmp.le.s32.totalorder 1, %s25
      %p243 = scmp.lt.s32.totalorder %s25, 3
      %p244 = pnand %p242, %p243
      %p245 = pneg %p244
      // Predicated region
      $region9: #{gcn_forward_fused.1} parent=5 // pred_check
        _
      $region10: #{gcn_forward_fused.1} parent=5 // pred_check_branch
        %247 = sbr.rel (%p244) target = $region12
      $region11: #{gcn_forward_fused.1} parent=5 // pred_region
        %s248 = ssub.s32 %s25, 1
        // Predicated region
        $region13: #{gcn_forward_fused.1} parent=11 // pred_check
          %p249 = pneg %p124
        $region14: #{gcn_forward_fused.1} parent=11 // pred_check_branch
          %251 = sbr.rel (%p249) target = $region16
        $region15: #{gcn_forward_fused.1} parent=11 // pred_region
          %s253 = ssub.s32 1024, 1024
          %254 = vsyncadd [#allocation9], %s253
          %s255 = sshll.u32 [#allocation8], 4
          %s256 = int_to_ptr.vmem [resolvable:$true] %s255
          %261 = dma.hbm_to_vmem [thread:$0]  %s3, 1024, %s256, [#allocation9], 64, 64, 4
        $region16: #{gcn_forward_fused.1} parent=11 // pred_fallthru
          _
        // Predicated region
        $region17: #{gcn_forward_fused.1} parent=11 // pred_check
          %p262 = pneg %p145
        $region18: #{gcn_forward_fused.1} parent=11 // pred_check_branch
          %264 = sbr.rel (%p262) target = $region20
        $region19: #{gcn_forward_fused.1} parent=11 // pred_region
          %s266 = ssub.s32 1024, 1024
          %267 = vsyncadd [#allocation9], %s266
          %s268 = sshll.u32 [#allocation10], 4
          %s269 = int_to_ptr.vmem [resolvable:$true] %s268
          %274 = dma.hbm_to_vmem [thread:$0]  %s4, 1024, %s269, [#allocation9], 64, 64, 4
        $region20: #{gcn_forward_fused.1} parent=11 // pred_fallthru
          _
        // Predicated region
        $region21: #{gcn_forward_fused.1} parent=11 // pred_check
          %p275 = pneg %p166
        $region22: #{gcn_forward_fused.1} parent=11 // pred_check_branch
          %277 = sbr.rel (%p275) target = $region24
        $region23: #{gcn_forward_fused.1} parent=11 // pred_region
          %s279 = ssub.s32 1024, 1024
          %280 = vsyncadd [#allocation12], %s279
          %s281 = sshll.u32 [#allocation11], 4
          %s282 = int_to_ptr.vmem [resolvable:$true] %s281
          %287 = dma.hbm_to_vmem [thread:$0]  %s5, 1024, %s282, [#allocation12], 64, 64, 4
        $region24: #{gcn_forward_fused.1} parent=11 // pred_fallthru
          _
        // Predicated region
        $region25: #{gcn_forward_fused.1} parent=11 // pred_check
          %p288 = pneg %p187
        $region26: #{gcn_forward_fused.1} parent=11 // pred_check_branch
          %290 = sbr.rel (%p288) target = $region28
        $region27: #{gcn_forward_fused.1} parent=11 // pred_region
          %s292 = ssub.s32 1024, 1024
          %293 = vsyncadd [#allocation12], %s292
          %s294 = sshll.u32 [#allocation13], 4
          %s295 = int_to_ptr.vmem [resolvable:$true] %s294
          %300 = dma.hbm_to_vmem [thread:$0]  %s6, 1024, %s295, [#allocation12], 64, 64, 4
        $region28: #{gcn_forward_fused.1} parent=11 // pred_fallthru
          _
        // Predicated region
        $region29: #{gcn_forward_fused.1} parent=11 // pred_check
          %p301 = pneg %p208
        $region30: #{gcn_forward_fused.1} parent=11 // pred_check_branch
          %303 = sbr.rel (%p301) target = $region32
        $region31: #{gcn_forward_fused.1} parent=11 // pred_region
          _
        $region32: #{gcn_forward_fused.1} parent=11 // pred_fallthru
          _
      $region12: #{gcn_forward_fused.1} parent=5 // pred_fallthru
        _
      %p304 = scmp.lt.s32.totalorder %s25, 2
      // Predicated region
      $region33: #{gcn_forward_fused.1} parent=5 // pred_check
        %p305 = pneg %p304
      $region34: #{gcn_forward_fused.1} parent=5 // pred_check_branch
        %307 = sbr.rel (%p305) target = $region36
      $region35: #{gcn_forward_fused.1} parent=5 // pred_region
        // Predicated region
        $region37: #{gcn_forward_fused.1} parent=35 // pred_check
          %p308 = pneg %p45
        $region38: #{gcn_forward_fused.1} parent=35 // pred_check_branch
          %310 = sbr.rel (%p308) target = $region40
        $region39: #{gcn_forward_fused.1} parent=35 // pred_region
          %s311 = sand.u32 %s35, 1
          %s312 = scalar_lea.sflag [#allocation3], %s311
          %s313 = sand.u32 %s35, 1
          %s314 = smul.addr %s313, 64
          %s315 = scalar_lea.vmem [#allocation2], %s314
          %s317 = ssub.s32 1024, 1024
          %318 = vsyncadd %s312, %s317
          %s319 = smul.addr %s25, 16
          %s320 = smul.addr %s319, 64
          %s321 = scalar_lea.hbm %s0, %s320
          %s322 = sshll.u32 %s315, 4
          %s323 = int_to_ptr.vmem [resolvable:$true] %s322
          %328 = dma.hbm_to_vmem [thread:$0]  %s321, 1024, %s323, %s312, 64, 64, 4
        $region40: #{gcn_forward_fused.1} parent=35 // pred_fallthru
          _
        // Predicated region
        $region41: #{gcn_forward_fused.1} parent=35 // pred_check
          %p329 = pneg %p71
        $region42: #{gcn_forward_fused.1} parent=35 // pred_check_branch
          %331 = sbr.rel (%p329) target = $region44
        $region43: #{gcn_forward_fused.1} parent=35 // pred_region
          %s332 = sand.u32 %s25, 1
          %s333 = scalar_lea.sflag [#allocation6], %s332
          %s334 = sand.u32 %s61, 1
          %s335 = smul.addr %s334, 64
          %s336 = scalar_lea.vmem [#allocation5], %s335
          %s338 = ssub.s32 1024, 1024
          %339 = vsyncadd %s333, %s338
          %s340 = smul.addr %s25, 16
          %s341 = smul.addr %s340, 64
          %s342 = scalar_lea.hbm %s1, %s341
          %s343 = sshll.u32 %s336, 4
          %s344 = int_to_ptr.vmem [resolvable:$true] %s343
          %349 = dma.hbm_to_vmem [thread:$0]  %s342, 1024, %s344, %s333, 64, 64, 4
        $region44: #{gcn_forward_fused.1} parent=35 // pred_fallthru
          _
        // Predicated region
        $region45: #{gcn_forward_fused.1} parent=35 // pred_check
          %p350 = pneg %p97
        $region46: #{gcn_forward_fused.1} parent=35 // pred_check_branch
          %352 = sbr.rel (%p350) target = $region48
        $region47: #{gcn_forward_fused.1} parent=35 // pred_region
          %s353 = sand.u32 %s25, 1
          %s354 = scalar_lea.sflag [#allocation6], %s353
          %s355 = sand.u32 %s87, 1
          %s356 = smul.addr %s355, 4
          %s357 = scalar_lea.vmem [#allocation7], %s356
          %s359 = ssub.s32 64, 64
          %360 = vsyncadd %s354, %s359
          %s361 = smul.addr %s25, 64
          %s362 = scalar_lea.hbm %s2, %s361
          %s364 = sshll.u32 %s357, 4
          %s365 = int_to_ptr.vmem [resolvable:$true] %s364
          %367 = dma.hbm_to_vmem [thread:$0]  %s362, 64, %s365, %s354
        $region48: #{gcn_forward_fused.1} parent=35 // pred_fallthru
          _
      $region36: #{gcn_forward_fused.1} parent=5 // pred_fallthru
        _
      %p368 = scmp.le.s32.totalorder 1, %s25
      %p369 = scmp.lt.s32.totalorder %s25, 3
      %p370 = pnand %p368, %p369
      %p371 = pneg %p370
      // Predicated region
      $region49: #{gcn_forward_fused.1} parent=5 // pred_check
        _
      $region50: #{gcn_forward_fused.1} parent=5 // pred_check_branch
        %373 = sbr.rel (%p370) target = $region52
      $region51: #{gcn_forward_fused.1} parent=5 // pred_region
        %s374 = ssub.s32 %s25, 1
        %s375 = sand.u32 %s38, 1
        %s376 = scalar_lea.sflag [#allocation3], %s375
        %s377 = sand.u32 %s38, 1
        %s378 = smul.addr %s377, 64
        %s379 = scalar_lea.vmem [#allocation2], %s378
        // Predicated region
        $region53: #{gcn_forward_fused.1} parent=51 // pred_check
          %p380 = pneg %p51
        $region54: #{gcn_forward_fused.1} parent=51 // pred_check_branch
          %382 = sbr.rel (%p380) target = $region56
        $region55: #{gcn_forward_fused.1} parent=51 // pred_region
          %383 = dma.done %s376, 1024
        $region56: #{gcn_forward_fused.1} parent=51 // pred_fallthru
          _
        %s384 = sand.u32 %s30, 1
        %s385 = scalar_lea.sflag [#allocation6], %s384
        %s386 = sand.u32 %s64, 1
        %s387 = smul.addr %s386, 64
        %s388 = scalar_lea.vmem [#allocation5], %s387
        // Predicated region
        $region57: #{gcn_forward_fused.1} parent=51 // pred_check
          %p389 = pneg %p77
        $region58: #{gcn_forward_fused.1} parent=51 // pred_check_branch
          %391 = sbr.rel (%p389) target = $region60
        $region59: #{gcn_forward_fused.1} parent=51 // pred_region
          %392 = dma.done %s385, 1024
        $region60: #{gcn_forward_fused.1} parent=51 // pred_fallthru
          _
        %s393 = sand.u32 %s30, 1
        %s394 = scalar_lea.sflag [#allocation6], %s393
        %s395 = sand.u32 %s90, 1
        %s396 = smul.addr %s395, 4
        %s397 = scalar_lea.vmem [#allocation7], %s396
        // Predicated region
        $region61: #{gcn_forward_fused.1} parent=51 // pred_check
          %p398 = pneg %p103
        $region62: #{gcn_forward_fused.1} parent=51 // pred_check_branch
          %400 = sbr.rel (%p398) target = $region64
        $region63: #{gcn_forward_fused.1} parent=51 // pred_region
          %401 = dma.done %s394, 64
        $region64: #{gcn_forward_fused.1} parent=51 // pred_fallthru
          _
        // Predicated region
        $region65: #{gcn_forward_fused.1} parent=51 // pred_check
          %p402 = pneg %p124
        $region66: #{gcn_forward_fused.1} parent=51 // pred_check_branch
          %404 = sbr.rel (%p402) target = $region68
        $region67: #{gcn_forward_fused.1} parent=51 // pred_region
          %405 = dma.done [#allocation9], 1024
        $region68: #{gcn_forward_fused.1} parent=51 // pred_fallthru
          _
        // Predicated region
        $region69: #{gcn_forward_fused.1} parent=51 // pred_check
          %p406 = pneg %p145
        $region70: #{gcn_forward_fused.1} parent=51 // pred_check_branch
          %408 = sbr.rel (%p406) target = $region72
        $region71: #{gcn_forward_fused.1} parent=51 // pred_region
          %409 = dma.done [#allocation9], 1024
        $region72: #{gcn_forward_fused.1} parent=51 // pred_fallthru
          _
        // Predicated region
        $region73: #{gcn_forward_fused.1} parent=51 // pred_check
          %p410 = pneg %p166
        $region74: #{gcn_forward_fused.1} parent=51 // pred_check_branch
          %412 = sbr.rel (%p410) target = $region76
        $region75: #{gcn_forward_fused.1} parent=51 // pred_region
          %413 = dma.done [#allocation12], 1024
        $region76: #{gcn_forward_fused.1} parent=51 // pred_fallthru
          _
        // Predicated region
        $region77: #{gcn_forward_fused.1} parent=51 // pred_check
          %p414 = pneg %p187
        $region78: #{gcn_forward_fused.1} parent=51 // pred_check_branch
          %416 = sbr.rel (%p414) target = $region80
        $region79: #{gcn_forward_fused.1} parent=51 // pred_region
          %417 = dma.done [#allocation12], 1024
        $region80: #{gcn_forward_fused.1} parent=51 // pred_fallthru
          _
        %s418 = sand.u32 %s38, 1
        %s419 = scalar_lea.sflag [#allocation3], %s418
        %s420 = sand.u32 %s38, 1
        %s421 = smul.addr %s420, 64
        %s422 = scalar_lea.vmem [#allocation2], %s421
        %p423 = pneg %p51
        %p424 = pneg %p48
        %s425 = sand.u32 %s30, 1
        %s426 = scalar_lea.sflag [#allocation6], %s425
        %s427 = sand.u32 %s64, 1
        %s428 = smul.addr %s427, 64
        %s429 = scalar_lea.vmem [#allocation5], %s428
        %p430 = pneg %p77
        %p431 = pneg %p74
        %s432 = sand.u32 %s30, 1
        %s433 = scalar_lea.sflag [#allocation6], %s432
        %s434 = sand.u32 %s90, 1
        %s435 = smul.addr %s434, 4
        %s436 = scalar_lea.vmem [#allocation7], %s435
        %p437 = pneg %p103
        %p438 = pneg %p100
        %p439 = pneg %p124
        %p440 = pneg %p121
        %p441 = pneg %p145
        %p442 = pneg %p142
        %p443 = pneg %p166
        %p444 = pneg %p163
        %p445 = pneg %p187
        %p446 = pneg %p184
        %p447 = pneg %p208
        %p448 = pneg %p205
        %p449 = pneg %p234
        %p450 = pneg %p231
        %s451 = sand.u32 %s221, 1
        %s452 = scalar_lea.sflag [#allocation4], %s451
        %s453 = sand.u32 %s221, 1
        %s454 = smul.addr %s453, 8
        %s455 = scalar_lea.vmem [#allocation14], %s454
        %v457 = vld [vmem:[%s379] sm:$0xf]
        %v458 = vld [vmem:[%s379 + $0x4] sm:$0xf]
        %v459 = vld [vmem:[%s379 + $0x8] sm:$0xf]
        %v460 = vld [vmem:[%s379 + $0xc] sm:$0xf]
        %v461 = vld [vmem:[%s379 + $0x10] sm:$0xf]
        %v462 = vld [vmem:[%s379 + $0x14] sm:$0xf]
        %v463 = vld [vmem:[%s379 + $0x18] sm:$0xf]
        %v464 = vld [vmem:[%s379 + $0x1c] sm:$0xf]
        %v465 = vld [vmem:[%s379 + $0x20] sm:$0xf]
        %v466 = vld [vmem:[%s379 + $0x24] sm:$0xf]
        %v467 = vld [vmem:[%s379 + $0x28] sm:$0xf]
        %v468 = vld [vmem:[%s379 + $0x2c] sm:$0xf]
        %v469 = vld [vmem:[%s379 + $0x30] sm:$0xf]
        %v470 = vld [vmem:[%s379 + $0x34] sm:$0xf]
        %v471 = vld [vmem:[%s379 + $0x38] sm:$0xf]
        %v472 = vld [vmem:[%s379 + $0x3c] sm:$0xf]
        %v473 = vunpack.c.l.bf16 %v457
        %v474 = vunpack.c.l.bf16 %v458
        %v475 = vunpack.c.l.bf16 %v459
        %v476 = vunpack.c.l.bf16 %v460
        %v477 = vunpack.c.l.bf16 %v461
        %v478 = vunpack.c.l.bf16 %v462
        %v479 = vunpack.c.l.bf16 %v463
        %v480 = vunpack.c.l.bf16 %v464
        %v481 = vunpack.c.l.bf16 %v465
        %v482 = vunpack.c.l.bf16 %v466
        %v483 = vunpack.c.l.bf16 %v467
        %v484 = vunpack.c.l.bf16 %v468
        %v485 = vunpack.c.l.bf16 %v469
        %v486 = vunpack.c.l.bf16 %v470
        %v487 = vunpack.c.l.bf16 %v471
        %v488 = vunpack.c.l.bf16 %v472
        %489 = vadd.xlane.f32.xlu0 %v473
        %v490 = vpop.xlane.xlu0 %489
        %491 = vadd.xlane.f32.xlu0 %v474
        %v492 = vpop.xlane.xlu0 %491
        %493 = vadd.xlane.f32.xlu0 %v475
        %v494 = vpop.xlane.xlu0 %493
        %495 = vadd.xlane.f32.xlu0 %v476
        %v496 = vpop.xlane.xlu0 %495
        %497 = vadd.xlane.f32.xlu0 %v477
        %v498 = vpop.xlane.xlu0 %497
        %499 = vadd.xlane.f32.xlu0 %v478
        %v500 = vpop.xlane.xlu0 %499
        %501 = vadd.xlane.f32.xlu0 %v479
        %v502 = vpop.xlane.xlu0 %501
        %503 = vadd.xlane.f32.xlu0 %v480
        %v504 = vpop.xlane.xlu0 %503
        %505 = vadd.xlane.f32.xlu0 %v481
        %v506 = vpop.xlane.xlu0 %505
        %507 = vadd.xlane.f32.xlu0 %v482
        %v508 = vpop.xlane.xlu0 %507
        %509 = vadd.xlane.f32.xlu0 %v483
        %v510 = vpop.xlane.xlu0 %509
        %511 = vadd.xlane.f32.xlu0 %v484
        %v512 = vpop.xlane.xlu0 %511
        %513 = vadd.xlane.f32.xlu0 %v485
        %v514 = vpop.xlane.xlu0 %513
        %515 = vadd.xlane.f32.xlu0 %v486
        %v516 = vpop.xlane.xlu0 %515
        %517 = vadd.xlane.f32.xlu0 %v487
        %v518 = vpop.xlane.xlu0 %517
        %519 = vadd.xlane.f32.xlu0 %v488
        %v520 = vpop.xlane.xlu0 %519
        %vm521 = vcmp.gt.f32.partialorder %v490, 0.0
        %vm522 = vcmp.gt.f32.partialorder %v492, 0.0
        %vm523 = vcmp.gt.f32.partialorder %v494, 0.0
        %vm524 = vcmp.gt.f32.partialorder %v496, 0.0
        %vm525 = vcmp.gt.f32.partialorder %v498, 0.0
        %vm526 = vcmp.gt.f32.partialorder %v500, 0.0
        %vm527 = vcmp.gt.f32.partialorder %v502, 0.0
        %vm528 = vcmp.gt.f32.partialorder %v504, 0.0
        %vm529 = vcmp.gt.f32.partialorder %v506, 0.0
        %vm530 = vcmp.gt.f32.partialorder %v508, 0.0
        %vm531 = vcmp.gt.f32.partialorder %v510, 0.0
        %vm532 = vcmp.gt.f32.partialorder %v512, 0.0
        %vm533 = vcmp.gt.f32.partialorder %v514, 0.0
        %vm534 = vcmp.gt.f32.partialorder %v516, 0.0
        %vm535 = vcmp.gt.f32.partialorder %v518, 0.0
        %vm536 = vcmp.gt.f32.partialorder %v520, 0.0
        %v537 = vld [vmem:[%s7] sm:$0x1]
        %v538 = vld [vmem:[%s7 + $0x1] sm:$0x1]
        %v539 = vld [vmem:[%s7 + $0x2] sm:$0x1]
        %v540 = vld [vmem:[%s7 + $0x3] sm:$0x1]
        %v541 = vld [vmem:[%s388] sm:$0xf]
        %v542 = vld [vmem:[%s388 + $0x4] sm:$0xf]
        %v543 = vld [vmem:[%s388 + $0x8] sm:$0xf]
        %v544 = vld [vmem:[%s388 + $0xc] sm:$0xf]
        %v545 = vld [vmem:[%s388 + $0x10] sm:$0xf]
        %v546 = vld [vmem:[%s388 + $0x14] sm:$0xf]
        %v547 = vld [vmem:[%s388 + $0x18] sm:$0xf]
        %v548 = vld [vmem:[%s388 + $0x1c] sm:$0xf]
        %v549 = vld [vmem:[%s388 + $0x20] sm:$0xf]
        %v550 = vld [vmem:[%s388 + $0x24] sm:$0xf]
        %v551 = vld [vmem:[%s388 + $0x28] sm:$0xf]
        %v552 = vld [vmem:[%s388 + $0x2c] sm:$0xf]
        %v553 = vld [vmem:[%s388 + $0x30] sm:$0xf]
        %v554 = vld [vmem:[%s388 + $0x34] sm:$0xf]
        %v555 = vld [vmem:[%s388 + $0x38] sm:$0xf]
        %v556 = vld [vmem:[%s388 + $0x3c] sm:$0xf]
        %v557 = vld [vmem:[#allocation8] sm:$0xf]
        %v558 = vld [vmem:[#allocation8 + $0x4] sm:$0xf]
        %v559 = vld [vmem:[#allocation8 + $0x8] sm:$0xf]
        %v560 = vld [vmem:[#allocation8 + $0xc] sm:$0xf]
        %v561 = vld [vmem:[#allocation8 + $0x10] sm:$0xf]
        %v562 = vld [vmem:[#allocation8 + $0x14] sm:$0xf]
        %v563 = vld [vmem:[#allocation8 + $0x18] sm:$0xf]
        %v564 = vld [vmem:[#allocation8 + $0x1c] sm:$0xf]
        %v565 = vld [vmem:[#allocation8 + $0x20] sm:$0xf]
        %v566 = vld [vmem:[#allocation8 + $0x24] sm:$0xf]
        %v567 = vld [vmem:[#allocation8 + $0x28] sm:$0xf]
        %v568 = vld [vmem:[#allocation8 + $0x2c] sm:$0xf]
        %v569 = vld [vmem:[#allocation8 + $0x30] sm:$0xf]
        %v570 = vld [vmem:[#allocation8 + $0x34] sm:$0xf]
        %v571 = vld [vmem:[#allocation8 + $0x38] sm:$0xf]
        %v572 = vld [vmem:[#allocation8 + $0x3c] sm:$0xf]
        %v589 = vunpack.c.l.b16 %v541
        %v590 = vunpack.c.l.b16 %v542
        %v591 = vunpack.c.l.b16 %v543
        %v592 = vunpack.c.l.b16 %v544
        %v593 = vunpack.c.l.b16 %v545
        %v594 = vunpack.c.l.b16 %v546
        %v595 = vunpack.c.l.b16 %v547
        %v596 = vunpack.c.l.b16 %v548
        %v597 = vunpack.c.l.b16 %v549
        %v598 = vunpack.c.l.b16 %v550
        %v599 = vunpack.c.l.b16 %v551
        %v600 = vunpack.c.l.b16 %v552
        %v601 = vunpack.c.l.b16 %v553
        %v602 = vunpack.c.l.b16 %v554
        %v603 = vunpack.c.l.b16 %v555
        %v604 = vunpack.c.l.b16 %v556
        %v605 = vpack.c.b16 %v590, %v589
        %v606 = vpack.c.b16 %v592, %v591
        %v607 = vpack.c.b16 %v594, %v593
        %v608 = vpack.c.b16 %v596, %v595
        %v609 = vpack.c.b16 %v598, %v597
        %v610 = vpack.c.b16 %v600, %v599
        %v611 = vpack.c.b16 %v602, %v601
        %v612 = vpack.c.b16 %v604, %v603
        %v637 = vunpack.c.l.b16 %v557
        %v638 = vunpack.c.l.b16 %v558
        %v639 = vunpack.c.l.b16 %v559
        %v640 = vunpack.c.l.b16 %v560
        %v641 = vunpack.c.l.b16 %v561
        %v642 = vunpack.c.l.b16 %v562
        %v643 = vunpack.c.l.b16 %v563
        %v644 = vunpack.c.l.b16 %v564
        %v645 = vunpack.c.l.b16 %v565
        %v646 = vunpack.c.l.b16 %v566
        %v647 = vunpack.c.l.b16 %v567
        %v648 = vunpack.c.l.b16 %v568
        %v649 = vunpack.c.l.b16 %v569
        %v650 = vunpack.c.l.b16 %v570
        %v651 = vunpack.c.l.b16 %v571
        %v652 = vunpack.c.l.b16 %v572
        %v653 = vpack.c.b16 %v638, %v637
        %v654 = vpack.c.b16 %v640, %v639
        %v655 = vpack.c.b16 %v642, %v641
        %v656 = vpack.c.b16 %v644, %v643
        %v657 = vpack.c.b16 %v646, %v645
        %v658 = vpack.c.b16 %v648, %v647
        %v659 = vpack.c.b16 %v650, %v649
        %v660 = vpack.c.b16 %v652, %v651
        %669 = vmatprep.subr.bf16.mxu0 0
        %670 = vmatpush1.bf16.msra.mxu0 %v653
        %671 = vmatprep.subr.bf16.mxu0 0
        %672 = vmatpush1.bf16.msra.mxu0 %v654
        %673 = vmatprep.subr.bf16.mxu0 0
        %674 = vmatpush1.bf16.msra.mxu0 %v655
        %675 = vmatprep.subr.bf16.mxu0 0
        %676 = vmatpush1.bf16.msra.mxu0 %v656
        %677 = vmatprep.subr.bf16.mxu0 0
        %678 = vmatpush1.bf16.msra.mxu0 %v657
        %679 = vmatprep.subr.bf16.mxu0 0
        %680 = vmatpush1.bf16.msra.mxu0 %v658
        %681 = vmatprep.subr.bf16.mxu0 0
        %682 = vmatpush1.bf16.msra.mxu0 %v659
        %683 = vmatprep.subr.bf16.mxu0 0
        %684 = vmatpush1.bf16.msra.mxu0 %v660
        %685 = vmatprep.subr.bf16.mxu0 0
        %686 = vmatpush1.bf16.msra.mxu0 0
        %687 = vmatprep.subr.bf16.mxu0 0
        %688 = vmatpush1.bf16.msra.mxu0 0
        %689 = vmatprep.subr.bf16.mxu0 0
        %690 = vmatpush1.bf16.msra.mxu0 0
        %691 = vmatprep.subr.bf16.mxu0 0
        %692 = vmatpush1.bf16.msra.mxu0 0
        %693 = vmatprep.subr.bf16.mxu0 0
        %694 = vmatpush1.bf16.msra.mxu0 0
        %695 = vmatprep.subr.bf16.mxu0 0
        %696 = vmatpush1.bf16.msra.mxu0 0
        %697 = vmatprep.subr.bf16.mxu0 0
        %698 = vmatpush1.bf16.msra.mxu0 0
        %699 = vmatprep.subr.bf16.mxu0 0
        %700 = vmatpush1.bf16.msra.mxu0 0
        %701 = vmatprep.mubr.bf16.mxu0 0
        %702 = vmatmul.mubr.bf16.gmra.mrb[0].mxu0 %v605
        %v703 = vpop.f32.mrb[0].mxu0
        %v704 = vadd.f32 0.0, %v703
        %v705 = vpop.f32.mrb[0].mxu0
        %v706 = vpop.f32.mrb[0].mxu0
        %v707 = vadd.f32 0.0, %v706
        %v708 = vpop.f32.mrb[0].mxu0
        %709 = vmatprep.mubr.bf16.mxu0 0
        %710 = vmatmul.mubr.bf16.gmra.mrb[0].mxu0 %v606
        %v711 = vpop.f32.mrb[0].mxu0
        %v712 = vadd.f32 0.0, %v711
        %v713 = vpop.f32.mrb[0].mxu0
        %v714 = vpop.f32.mrb[0].mxu0
        %v715 = vadd.f32 0.0, %v714
        %v716 = vpop.f32.mrb[0].mxu0
        %717 = vmatprep.mubr.bf16.mxu0 0
        %718 = vmatmul.mubr.bf16.gmra.mrb[0].mxu0 %v607
        %v719 = vpop.f32.mrb[0].mxu0
        %v720 = vadd.f32 0.0, %v719
        %v721 = vpop.f32.mrb[0].mxu0
        %v722 = vpop.f32.mrb[0].mxu0
        %v723 = vadd.f32 0.0, %v722
        %v724 = vpop.f32.mrb[0].mxu0
        %725 = vmatprep.mubr.bf16.mxu0 0
        %726 = vmatmul.mubr.bf16.gmra.mrb[0].mxu0 %v608
        %v727 = vpop.f32.mrb[0].mxu0
        %v728 = vadd.f32 0.0, %v727
        %v729 = vpop.f32.mrb[0].mxu0
        %v730 = vpop.f32.mrb[0].mxu0
        %v731 = vadd.f32 0.0, %v730
        %v732 = vpop.f32.mrb[0].mxu0
        %733 = vmatprep.mubr.bf16.mxu0 0
        %734 = vmatmul.mubr.bf16.gmra.mrb[0].mxu0 %v609
        %v735 = vpop.f32.mrb[0].mxu0
        %v736 = vadd.f32 0.0, %v735
        %v737 = vpop.f32.mrb[0].mxu0
        %v738 = vpop.f32.mrb[0].mxu0
        %v739 = vadd.f32 0.0, %v738
        %v740 = vpop.f32.mrb[0].mxu0
        %741 = vmatprep.mubr.bf16.mxu0 0
        %742 = vmatmul.mubr.bf16.gmra.mrb[0].mxu0 %v610
        %v743 = vpop.f32.mrb[0].mxu0
        %v744 = vadd.f32 0.0, %v743
        %v745 = vpop.f32.mrb[0].mxu0
        %v746 = vpop.f32.mrb[0].mxu0
        %v747 = vadd.f32 0.0, %v746
        %v748 = vpop.f32.mrb[0].mxu0
        %749 = vmatprep.mubr.bf16.mxu0 0
        %750 = vmatmul.mubr.bf16.gmra.mrb[0].mxu0 %v611
        %v751 = vpop.f32.mrb[0].mxu0
        %v752 = vadd.f32 0.0, %v751
        %v753 = vpop.f32.mrb[0].mxu0
        %v754 = vpop.f32.mrb[0].mxu0
        %v755 = vadd.f32 0.0, %v754
        %v756 = vpop.f32.mrb[0].mxu0
        %757 = vmatprep.mubr.bf16.mxu0 0
        %758 = vmatmul.mubr.bf16.gmra.mrb[0].mxu0 %v612
        %v759 = vpop.f32.mrb[0].mxu0
        %v760 = vadd.f32 0.0, %v759
        %v761 = vpop.f32.mrb[0].mxu0
        %v762 = vpop.f32.mrb[0].mxu0
        %v763 = vadd.f32 0.0, %v762
        %v764 = vpop.f32.mrb[0].mxu0
        %765 = vdwg.mxu0
        %v766 = vpack.c.bf16 %v707, %v704
        %v767 = vpack.c.bf16 %v715, %v712
        %v768 = vpack.c.bf16 %v723, %v720
        %v769 = vpack.c.bf16 %v731, %v728
        %v770 = vpack.c.bf16 %v739, %v736
        %v771 = vpack.c.bf16 %v747, %v744
        %v772 = vpack.c.bf16 %v755, %v752
        %v773 = vpack.c.bf16 %v763, %v760
        %v774 = vlaneseq
        %v775 = vshrl.u32 %v774, 7
        %v776 = vsub.s32 0, %v775
        %v777 = vrot.slane %v537, %v776
        %v794 = vunpack.c.l.b16 %v457
        %v795 = vunpack.c.l.b16 %v458
        %v796 = vunpack.c.l.b16 %v459
        %v797 = vunpack.c.l.b16 %v460
        %v798 = vunpack.c.l.b16 %v461
        %v799 = vunpack.c.l.b16 %v462
        %v800 = vunpack.c.l.b16 %v463
        %v801 = vunpack.c.l.b16 %v464
        %v802 = vunpack.c.l.b16 %v465
        %v803 = vunpack.c.l.b16 %v466
        %v804 = vunpack.c.l.b16 %v467
        %v805 = vunpack.c.l.b16 %v468
        %v806 = vunpack.c.l.b16 %v469
        %v807 = vunpack.c.l.b16 %v470
        %v808 = vunpack.c.l.b16 %v471
        %v809 = vunpack.c.l.b16 %v472
        %v810 = vpack.c.b16 %v795, %v794
        %v811 = vpack.c.b16 %v797, %v796
        %v812 = vpack.c.b16 %v799, %v798
        %v813 = vpack.c.b16 %v801, %v800
        %v814 = vpack.c.b16 %v803, %v802
        %v815 = vpack.c.b16 %v805, %v804
        %v816 = vpack.c.b16 %v807, %v806
        %v817 = vpack.c.b16 %v809, %v808
        %826 = vmatprep.subr.bf16.mxu0 0
        %827 = vmatpush1.bf16.msra.mxu0 %v766
        %828 = vmatprep.subr.bf16.mxu0 0
        %829 = vmatpush1.bf16.msra.mxu0 %v767
        %830 = vmatprep.subr.bf16.mxu0 0
        %831 = vmatpush1.bf16.msra.mxu0 %v768
        %832 = vmatprep.subr.bf16.mxu0 0
        %833 = vmatpush1.bf16.msra.mxu0 %v769
        %834 = vmatprep.subr.bf16.mxu0 0
        %835 = vmatpush1.bf16.msra.mxu0 %v770
        %836 = vmatprep.subr.bf16.mxu0 0
        %837 = vmatpush1.bf16.msra.mxu0 %v771
        %838 = vmatprep.subr.bf16.mxu0 0
        %839 = vmatpush1.bf16.msra.mxu0 %v772
        %840 = vmatprep.subr.bf16.mxu0 0
        %841 = vmatpush1.bf16.msra.mxu0 %v773
        %842 = vmatprep.subr.bf16.mxu0 0
        %843 = vmatpush1.bf16.msra.mxu0 0
        %844 = vmatprep.subr.bf16.mxu0 0
        %845 = vmatpush1.bf16.msra.mxu0 0
        %846 = vmatprep.subr.bf16.mxu0 0
        %847 = vmatpush1.bf16.msra.mxu0 0
        %848 = vmatprep.subr.bf16.mxu0 0
        %849 = vmatpush1.bf16.msra.mxu0 0
        %850 = vmatprep.subr.bf16.mxu0 0
        %851 = vmatpush1.bf16.msra.mxu0 0
        %852 = vmatprep.subr.bf16.mxu0 0
        %853 = vmatpush1.bf16.msra.mxu0 0
        %854 = vmatprep.subr.bf16.mxu0 0
        %855 = vmatpush1.bf16.msra.mxu0 0
        %856 = vmatprep.subr.bf16.mxu0 0
        %857 = vmatpush1.bf16.msra.mxu0 0
        %858 = vmatprep.mubr.bf16.mxu0 0
        %859 = vmatmul.mubr.bf16.gmra.mrb[0].mxu0 %v810
        %v860 = vpop.f32.mrb[0].mxu0
        %v861 = vadd.f32 %v777, %v860
        %v862 = vpop.f32.mrb[0].mxu0
        %v863 = vpop.f32.mrb[0].mxu0
        %v864 = vadd.f32 %v777, %v863
        %v865 = vpop.f32.mrb[0].mxu0
        %866 = vmatprep.mubr.bf16.mxu0 0
        %867 = vmatmul.mubr.bf16.gmra.mrb[0].mxu0 %v811
        %v868 = vpop.f32.mrb[0].mxu0
        %v869 = vadd.f32 %v777, %v868
        %v870 = vpop.f32.mrb[0].mxu0
        %v871 = vpop.f32.mrb[0].mxu0
        %v872 = vadd.f32 %v777, %v871
        %v873 = vpop.f32.mrb[0].mxu0
        %874 = vmatprep.mubr.bf16.mxu0 0
        %875 = vmatmul.mubr.bf16.gmra.mrb[0].mxu0 %v812
        %v876 = vpop.f32.mrb[0].mxu0
        %v877 = vadd.f32 %v777, %v876
        %v878 = vpop.f32.mrb[0].mxu0
        %v879 = vpop.f32.mrb[0].mxu0
        %v880 = vadd.f32 %v777, %v879
        %v881 = vpop.f32.mrb[0].mxu0
        %882 = vmatprep.mubr.bf16.mxu0 0
        %883 = vmatmul.mubr.bf16.gmra.mrb[0].mxu0 %v813
        %v884 = vpop.f32.mrb[0].mxu0
        %v885 = vadd.f32 %v777, %v884
        %v886 = vpop.f32.mrb[0].mxu0
        %v887 = vpop.f32.mrb[0].mxu0
        %v888 = vadd.f32 %v777, %v887
        %v889 = vpop.f32.mrb[0].mxu0
        %890 = vmatprep.mubr.bf16.mxu0 0
        %891 = vmatmul.mubr.bf16.gmra.mrb[0].mxu0 %v814
        %v892 = vpop.f32.mrb[0].mxu0
        %v893 = vadd.f32 %v777, %v892
        %v894 = vpop.f32.mrb[0].mxu0
        %v895 = vpop.f32.mrb[0].mxu0
        %v896 = vadd.f32 %v777, %v895
        %v897 = vpop.f32.mrb[0].mxu0
        %898 = vmatprep.mubr.bf16.mxu0 0
        %899 = vmatmul.mubr.bf16.gmra.mrb[0].mxu0 %v815
        %v900 = vpop.f32.mrb[0].mxu0
        %v901 = vadd.f32 %v777, %v900
        %v902 = vpop.f32.mrb[0].mxu0
        %v903 = vpop.f32.mrb[0].mxu0
        %v904 = vadd.f32 %v777, %v903
        %v905 = vpop.f32.mrb[0].mxu0
        %906 = vmatprep.mubr.bf16.mxu0 0
        %907 = vmatmul.mubr.bf16.gmra.mrb[0].mxu0 %v816
        %v908 = vpop.f32.mrb[0].mxu0
        %v909 = vadd.f32 %v777, %v908
        %v910 = vpop.f32.mrb[0].mxu0
        %v911 = vpop.f32.mrb[0].mxu0
        %v912 = vadd.f32 %v777, %v911
        %v913 = vpop.f32.mrb[0].mxu0
        %914 = vmatprep.mubr.bf16.mxu0 0
        %915 = vmatmul.mubr.bf16.gmra.mrb[0].mxu0 %v817
        %v916 = vpop.f32.mrb[0].mxu0
        %v917 = vadd.f32 %v777, %v916
        %v918 = vpop.f32.mrb[0].mxu0
        %v919 = vpop.f32.mrb[0].mxu0
        %v920 = vadd.f32 %v777, %v919
        %v921 = vpop.f32.mrb[0].mxu0
        %922 = vdwg.mxu0
        %v923 = vmax.f32 %v861, 0.0
        %v924 = vmax.f32 %v864, 0.0
        %v925 = vmax.f32 %v869, 0.0
        %v926 = vmax.f32 %v872, 0.0
        %v927 = vmax.f32 %v877, 0.0
        %v928 = vmax.f32 %v880, 0.0
        %v929 = vmax.f32 %v885, 0.0
        %v930 = vmax.f32 %v888, 0.0
        %v931 = vmax.f32 %v893, 0.0
        %v932 = vmax.f32 %v896, 0.0
        %v933 = vmax.f32 %v901, 0.0
        %v934 = vmax.f32 %v904, 0.0
        %v935 = vmax.f32 %v909, 0.0
        %v936 = vmax.f32 %v912, 0.0
        %v937 = vmax.f32 %v917, 0.0
        %v938 = vmax.f32 %v920, 0.0
        %v939 = vsel %vm521, 1, 0
        %v940 = vsel %vm522, 1, 0
        %v941 = vsel %vm523, 1, 0
        %v942 = vsel %vm524, 1, 0
        %v943 = vsel %vm525, 1, 0
        %v944 = vsel %vm526, 1, 0
        %v945 = vsel %vm527, 1, 0
        %v946 = vsel %vm528, 1, 0
        %v947 = vsel %vm529, 1, 0
        %v948 = vsel %vm530, 1, 0
        %v949 = vsel %vm531, 1, 0
        %v950 = vsel %vm532, 1, 0
        %v951 = vsel %vm533, 1, 0
        %v952 = vsel %vm534, 1, 0
        %v953 = vsel %vm535, 1, 0
        %v954 = vsel %vm536, 1, 0
        %vm955 = vcmp.eq.s32.totalorder %v939, 1
        %vm956 = vcmp.eq.s32.totalorder %v940, 1
        %vm957 = vcmp.eq.s32.totalorder %v941, 1
        %vm958 = vcmp.eq.s32.totalorder %v942, 1
        %vm959 = vcmp.eq.s32.totalorder %v943, 1
        %vm960 = vcmp.eq.s32.totalorder %v944, 1
        %vm961 = vcmp.eq.s32.totalorder %v945, 1
        %vm962 = vcmp.eq.s32.totalorder %v946, 1
        %vm963 = vcmp.eq.s32.totalorder %v947, 1
        %vm964 = vcmp.eq.s32.totalorder %v948, 1
        %vm965 = vcmp.eq.s32.totalorder %v949, 1
        %vm966 = vcmp.eq.s32.totalorder %v950, 1
        %vm967 = vcmp.eq.s32.totalorder %v951, 1
        %vm968 = vcmp.eq.s32.totalorder %v952, 1
        %vm969 = vcmp.eq.s32.totalorder %v953, 1
        %vm970 = vcmp.eq.s32.totalorder %v954, 1
        %v971 = vsel %vm955, %v923, 0.0
        %v972 = vsel %vm956, %v924, 0.0
        %v973 = vsel %vm957, %v925, 0.0
        %v974 = vsel %vm958, %v926, 0.0
        %v975 = vsel %vm959, %v927, 0.0
        %v976 = vsel %vm960, %v928, 0.0
        %v977 = vsel %vm961, %v929, 0.0
        %v978 = vsel %vm962, %v930, 0.0
        %v979 = vsel %vm963, %v931, 0.0
        %v980 = vsel %vm964, %v932, 0.0
        %v981 = vsel %vm965, %v933, 0.0
        %v982 = vsel %vm966, %v934, 0.0
        %v983 = vsel %vm967, %v935, 0.0
        %v984 = vsel %vm968, %v936, 0.0
        %v985 = vsel %vm969, %v937, 0.0
        %v986 = vsel %vm970, %v938, 0.0
        %v987 = vpack.c.bf16 %v972, %v971
        %v988 = vpack.c.bf16 %v974, %v973
        %v989 = vpack.c.bf16 %v976, %v975
        %v990 = vpack.c.bf16 %v978, %v977
        %v991 = vpack.c.bf16 %v980, %v979
        %v992 = vpack.c.bf16 %v982, %v981
        %v993 = vpack.c.bf16 %v984, %v983
        %v994 = vpack.c.bf16 %v986, %v985
        %v995 = vld [vmem:[#allocation10] sm:$0xf]
        %v996 = vld [vmem:[#allocation10 + $0x4] sm:$0xf]
        %v997 = vld [vmem:[#allocation10 + $0x8] sm:$0xf]
        %v998 = vld [vmem:[#allocation10 + $0xc] sm:$0xf]
        %v999 = vld [vmem:[#allocation10 + $0x10] sm:$0xf]
        %v1000 = vld [vmem:[#allocation10 + $0x14] sm:$0xf]
        %v1001 = vld [vmem:[#allocation10 + $0x18] sm:$0xf]
        %v1002 = vld [vmem:[#allocation10 + $0x1c] sm:$0xf]
        %v1003 = vld [vmem:[#allocation10 + $0x20] sm:$0xf]
        %v1004 = vld [vmem:[#allocation10 + $0x24] sm:$0xf]
        %v1005 = vld [vmem:[#allocation10 + $0x28] sm:$0xf]
        %v1006 = vld [vmem:[#allocation10 + $0x2c] sm:$0xf]
        %v1007 = vld [vmem:[#allocation10 + $0x30] sm:$0xf]
        %v1008 = vld [vmem:[#allocation10 + $0x34] sm:$0xf]
        %v1009 = vld [vmem:[#allocation10 + $0x38] sm:$0xf]
        %v1010 = vld [vmem:[#allocation10 + $0x3c] sm:$0xf]
        %v1027 = vunpack.c.l.b16 %v995
        %v1028 = vunpack.c.l.b16 %v996
        %v1029 = vunpack.c.l.b16 %v997
        %v1030 = vunpack.c.l.b16 %v998
        %v1031 = vunpack.c.l.b16 %v999
        %v1032 = vunpack.c.l.b16 %v1000
        %v1033 = vunpack.c.l.b16 %v1001
        %v1034 = vunpack.c.l.b16 %v1002
        %v1035 = vunpack.c.l.b16 %v1003
        %v1036 = vunpack.c.l.b16 %v1004
        %v1037 = vunpack.c.l.b16 %v1005
        %v1038 = vunpack.c.l.b16 %v1006
        %v1039 = vunpack.c.l.b16 %v1007
        %v1040 = vunpack.c.l.b16 %v1008
        %v1041 = vunpack.c.l.b16 %v1009
        %v1042 = vunpack.c.l.b16 %v1010
        %v1043 = vpack.c.b16 %v1028, %v1027
        %v1044 = vpack.c.b16 %v1030, %v1029
        %v1045 = vpack.c.b16 %v1032, %v1031
        %v1046 = vpack.c.b16 %v1034, %v1033
        %v1047 = vpack.c.b16 %v1036, %v1035
        %v1048 = vpack.c.b16 %v1038, %v1037
        %v1049 = vpack.c.b16 %v1040, %v1039
        %v1050 = vpack.c.b16 %v1042, %v1041
        %1059 = vmatprep.subr.bf16.mxu0 0
        %1060 = vmatpush1.bf16.msra.mxu0 %v1043
        %1061 = vmatprep.subr.bf16.mxu0 0
        %1062 = vmatpush1.bf16.msra.mxu0 %v1044
        %1063 = vmatprep.subr.bf16.mxu0 0
        %1064 = vmatpush1.bf16.msra.mxu0 %v1045
        %1065 = vmatprep.subr.bf16.mxu0 0
        %1066 = vmatpush1.bf16.msra.mxu0 %v1046
        %1067 = vmatprep.subr.bf16.mxu0 0
        %1068 = vmatpush1.bf16.msra.mxu0 %v1047
        %1069 = vmatprep.subr.bf16.mxu0 0
        %1070 = vmatpush1.bf16.msra.mxu0 %v1048
        %1071 = vmatprep.subr.bf16.mxu0 0
        %1072 = vmatpush1.bf16.msra.mxu0 %v1049
        %1073 = vmatprep.subr.bf16.mxu0 0
        %1074 = vmatpush1.bf16.msra.mxu0 %v1050
        %1075 = vmatprep.subr.bf16.mxu0 0
        %1076 = vmatpush1.bf16.msra.mxu0 0
        %1077 = vmatprep.subr.bf16.mxu0 0
        %1078 = vmatpush1.bf16.msra.mxu0 0
        %1079 = vmatprep.subr.bf16.mxu0 0
        %1080 = vmatpush1.bf16.msra.mxu0 0
        %1081 = vmatprep.subr.bf16.mxu0 0
        %1082 = vmatpush1.bf16.msra.mxu0 0
        %1083 = vmatprep.subr.bf16.mxu0 0
        %1084 = vmatpush1.bf16.msra.mxu0 0
        %1085 = vmatprep.subr.bf16.mxu0 0
        %1086 = vmatpush1.bf16.msra.mxu0 0
        %1087 = vmatprep.subr.bf16.mxu0 0
        %1088 = vmatpush1.bf16.msra.mxu0 0
        %1089 = vmatprep.subr.bf16.mxu0 0
        %1090 = vmatpush1.bf16.msra.mxu0 0
        %1091 = vmatprep.mubr.bf16.mxu0 0
        %1092 = vmatmul.mubr.bf16.gmra.mrb[0].mxu0 %v987
        %v1093 = vpop.f32.mrb[0].mxu0
        %v1094 = vadd.f32 0.0, %v1093
        %v1095 = vpop.f32.mrb[0].mxu0
        %v1096 = vpop.f32.mrb[0].mxu0
        %v1097 = vadd.f32 0.0, %v1096
        %v1098 = vpop.f32.mrb[0].mxu0
        %1099 = vmatprep.mubr.bf16.mxu0 0
        %1100 = vmatmul.mubr.bf16.gmra.mrb[0].mxu0 %v988
        %v1101 = vpop.f32.mrb[0].mxu0
        %v1102 = vadd.f32 0.0, %v1101
        %v1103 = vpop.f32.mrb[0].mxu0
        %v1104 = vpop.f32.mrb[0].mxu0
        %v1105 = vadd.f32 0.0, %v1104
        %v1106 = vpop.f32.mrb[0].mxu0
        %1107 = vmatprep.mubr.bf16.mxu0 0
        %1108 = vmatmul.mubr.bf16.gmra.mrb[0].mxu0 %v989
        %v1109 = vpop.f32.mrb[0].mxu0
        %v1110 = vadd.f32 0.0, %v1109
        %v1111 = vpop.f32.mrb[0].mxu0
        %v1112 = vpop.f32.mrb[0].mxu0
        %v1113 = vadd.f32 0.0, %v1112
        %v1114 = vpop.f32.mrb[0].mxu0
        %1115 = vmatprep.mubr.bf16.mxu0 0
        %1116 = vmatmul.mubr.bf16.gmra.mrb[0].mxu0 %v990
        %v1117 = vpop.f32.mrb[0].mxu0
        %v1118 = vadd.f32 0.0, %v1117
        %v1119 = vpop.f32.mrb[0].mxu0
        %v1120 = vpop.f32.mrb[0].mxu0
        %v1121 = vadd.f32 0.0, %v1120
        %v1122 = vpop.f32.mrb[0].mxu0
        %1123 = vmatprep.mubr.bf16.mxu0 0
        %1124 = vmatmul.mubr.bf16.gmra.mrb[0].mxu0 %v991
        %v1125 = vpop.f32.mrb[0].mxu0
        %v1126 = vadd.f32 0.0, %v1125
        %v1127 = vpop.f32.mrb[0].mxu0
        %v1128 = vpop.f32.mrb[0].mxu0
        %v1129 = vadd.f32 0.0, %v1128
        %v1130 = vpop.f32.mrb[0].mxu0
        %1131 = vmatprep.mubr.bf16.mxu0 0
        %1132 = vmatmul.mubr.bf16.gmra.mrb[0].mxu0 %v992
        %v1133 = vpop.f32.mrb[0].mxu0
        %v1134 = vadd.f32 0.0, %v1133
        %v1135 = vpop.f32.mrb[0].mxu0
        %v1136 = vpop.f32.mrb[0].mxu0
        %v1137 = vadd.f32 0.0, %v1136
        %v1138 = vpop.f32.mrb[0].mxu0
        %1139 = vmatprep.mubr.bf16.mxu0 0
        %1140 = vmatmul.mubr.bf16.gmra.mrb[0].mxu0 %v993
        %v1141 = vpop.f32.mrb[0].mxu0
        %v1142 = vadd.f32 0.0, %v1141
        %v1143 = vpop.f32.mrb[0].mxu0
        %v1144 = vpop.f32.mrb[0].mxu0
        %v1145 = vadd.f32 0.0, %v1144
        %v1146 = vpop.f32.mrb[0].mxu0
        %1147 = vmatprep.mubr.bf16.mxu0 0
        %1148 = vmatmul.mubr.bf16.gmra.mrb[0].mxu0 %v994
        %v1149 = vpop.f32.mrb[0].mxu0
        %v1150 = vadd.f32 0.0, %v1149
        %v1151 = vpop.f32.mrb[0].mxu0
        %v1152 = vpop.f32.mrb[0].mxu0
        %v1153 = vadd.f32 0.0, %v1152
        %v1154 = vpop.f32.mrb[0].mxu0
        %1155 = vdwg.mxu0
        %v1156 = vpack.c.bf16 %v1097, %v1094
        %v1157 = vpack.c.bf16 %v1105, %v1102
        %v1158 = vpack.c.bf16 %v1113, %v1110
        %v1159 = vpack.c.bf16 %v1121, %v1118
        %v1160 = vpack.c.bf16 %v1129, %v1126
        %v1161 = vpack.c.bf16 %v1137, %v1134
        %v1162 = vpack.c.bf16 %v1145, %v1142
        %v1163 = vpack.c.bf16 %v1153, %v1150
        %v1164 = vlaneseq
        %v1165 = vshrl.u32 %v1164, 7
        %v1166 = vsub.s32 0, %v1165
        %v1167 = vrot.slane %v538, %v1166
        %1168 = vmatprep.subr.bf16.mxu0 0
        %1169 = vmatpush1.bf16.msra.mxu0 %v1156
        %1170 = vmatprep.subr.bf16.mxu0 0
        %1171 = vmatpush1.bf16.msra.mxu0 %v1157
        %1172 = vmatprep.subr.bf16.mxu0 0
        %1173 = vmatpush1.bf16.msra.mxu0 %v1158
        %1174 = vmatprep.subr.bf16.mxu0 0
        %1175 = vmatpush1.bf16.msra.mxu0 %v1159
        %1176 = vmatprep.subr.bf16.mxu0 0
        %1177 = vmatpush1.bf16.msra.mxu0 %v1160
        %1178 = vmatprep.subr.bf16.mxu0 0
        %1179 = vmatpush1.bf16.msra.mxu0 %v1161
        %1180 = vmatprep.subr.bf16.mxu0 0
        %1181 = vmatpush1.bf16.msra.mxu0 %v1162
        %1182 = vmatprep.subr.bf16.mxu0 0
        %1183 = vmatpush1.bf16.msra.mxu0 %v1163
        %1184 = vmatprep.subr.bf16.mxu0 0
        %1185 = vmatpush1.bf16.msra.mxu0 0
        %1186 = vmatprep.subr.bf16.mxu0 0
        %1187 = vmatpush1.bf16.msra.mxu0 0
        %1188 = vmatprep.subr.bf16.mxu0 0
        %1189 = vmatpush1.bf16.msra.mxu0 0
        %1190 = vmatprep.subr.bf16.mxu0 0
        %1191 = vmatpush1.bf16.msra.mxu0 0
        %1192 = vmatprep.subr.bf16.mxu0 0
        %1193 = vmatpush1.bf16.msra.mxu0 0
        %1194 = vmatprep.subr.bf16.mxu0 0
        %1195 = vmatpush1.bf16.msra.mxu0 0
        %1196 = vmatprep.subr.bf16.mxu0 0
        %1197 = vmatpush1.bf16.msra.mxu0 0
        %1198 = vmatprep.subr.bf16.mxu0 0
        %1199 = vmatpush1.bf16.msra.mxu0 0
        %1200 = vmatprep.mubr.bf16.mxu0 0
        %1201 = vmatmul.mubr.bf16.gmra.mrb[0].mxu0 %v810
        %v1202 = vpop.f32.mrb[0].mxu0
        %v1203 = vadd.f32 %v1167, %v1202
        %v1204 = vpop.f32.mrb[0].mxu0
        %v1205 = vpop.f32.mrb[0].mxu0
        %v1206 = vadd.f32 %v1167, %v1205
        %v1207 = vpop.f32.mrb[0].mxu0
        %1208 = vmatprep.mubr.bf16.mxu0 0
        %1209 = vmatmul.mubr.bf16.gmra.mrb[0].mxu0 %v811
        %v1210 = vpop.f32.mrb[0].mxu0
        %v1211 = vadd.f32 %v1167, %v1210
        %v1212 = vpop.f32.mrb[0].mxu0
        %v1213 = vpop.f32.mrb[0].mxu0
        %v1214 = vadd.f32 %v1167, %v1213
        %v1215 = vpop.f32.mrb[0].mxu0
        %1216 = vmatprep.mubr.bf16.mxu0 0
        %1217 = vmatmul.mubr.bf16.gmra.mrb[0].mxu0 %v812
        %v1218 = vpop.f32.mrb[0].mxu0
        %v1219 = vadd.f32 %v1167, %v1218
        %v1220 = vpop.f32.mrb[0].mxu0
        %v1221 = vpop.f32.mrb[0].mxu0
        %v1222 = vadd.f32 %v1167, %v1221
        %v1223 = vpop.f32.mrb[0].mxu0
        %1224 = vmatprep.mubr.bf16.mxu0 0
        %1225 = vmatmul.mubr.bf16.gmra.mrb[0].mxu0 %v813
        %v1226 = vpop.f32.mrb[0].mxu0
        %v1227 = vadd.f32 %v1167, %v1226
        %v1228 = vpop.f32.mrb[0].mxu0
        %v1229 = vpop.f32.mrb[0].mxu0
        %v1230 = vadd.f32 %v1167, %v1229
        %v1231 = vpop.f32.mrb[0].mxu0
        %1232 = vmatprep.mubr.bf16.mxu0 0
        %1233 = vmatmul.mubr.bf16.gmra.mrb[0].mxu0 %v814
        %v1234 = vpop.f32.mrb[0].mxu0
        %v1235 = vadd.f32 %v1167, %v1234
        %v1236 = vpop.f32.mrb[0].mxu0
        %v1237 = vpop.f32.mrb[0].mxu0
        %v1238 = vadd.f32 %v1167, %v1237
        %v1239 = vpop.f32.mrb[0].mxu0
        %1240 = vmatprep.mubr.bf16.mxu0 0
        %1241 = vmatmul.mubr.bf16.gmra.mrb[0].mxu0 %v815
        %v1242 = vpop.f32.mrb[0].mxu0
        %v1243 = vadd.f32 %v1167, %v1242
        %v1244 = vpop.f32.mrb[0].mxu0
        %v1245 = vpop.f32.mrb[0].mxu0
        %v1246 = vadd.f32 %v1167, %v1245
        %v1247 = vpop.f32.mrb[0].mxu0
        %1248 = vmatprep.mubr.bf16.mxu0 0
        %1249 = vmatmul.mubr.bf16.gmra.mrb[0].mxu0 %v816
        %v1250 = vpop.f32.mrb[0].mxu0
        %v1251 = vadd.f32 %v1167, %v1250
        %v1252 = vpop.f32.mrb[0].mxu0
        %v1253 = vpop.f32.mrb[0].mxu0
        %v1254 = vadd.f32 %v1167, %v1253
        %v1255 = vpop.f32.mrb[0].mxu0
        %1256 = vmatprep.mubr.bf16.mxu0 0
        %1257 = vmatmul.mubr.bf16.gmra.mrb[0].mxu0 %v817
        %v1258 = vpop.f32.mrb[0].mxu0
        %v1259 = vadd.f32 %v1167, %v1258
        %v1260 = vpop.f32.mrb[0].mxu0
        %v1261 = vpop.f32.mrb[0].mxu0
        %v1262 = vadd.f32 %v1167, %v1261
        %v1263 = vpop.f32.mrb[0].mxu0
        %1264 = vdwg.mxu0
        %v1265 = vmax.f32 %v1203, 0.0
        %v1266 = vmax.f32 %v1206, 0.0
        %v1267 = vmax.f32 %v1211, 0.0
        %v1268 = vmax.f32 %v1214, 0.0
        %v1269 = vmax.f32 %v1219, 0.0
        %v1270 = vmax.f32 %v1222, 0.0
        %v1271 = vmax.f32 %v1227, 0.0
        %v1272 = vmax.f32 %v1230, 0.0
        %v1273 = vmax.f32 %v1235, 0.0
        %v1274 = vmax.f32 %v1238, 0.0
        %v1275 = vmax.f32 %v1243, 0.0
        %v1276 = vmax.f32 %v1246, 0.0
        %v1277 = vmax.f32 %v1251, 0.0
        %v1278 = vmax.f32 %v1254, 0.0
        %v1279 = vmax.f32 %v1259, 0.0
        %v1280 = vmax.f32 %v1262, 0.0
        %v1281 = vsel %vm955, %v1265, 0.0
        %v1282 = vsel %vm956, %v1266, 0.0
        %v1283 = vsel %vm957, %v1267, 0.0
        %v1284 = vsel %vm958, %v1268, 0.0
        %v1285 = vsel %vm959, %v1269, 0.0
        %v1286 = vsel %vm960, %v1270, 0.0
        %v1287 = vsel %vm961, %v1271, 0.0
        %v1288 = vsel %vm962, %v1272, 0.0
        %v1289 = vsel %vm963, %v1273, 0.0
        %v1290 = vsel %vm964, %v1274, 0.0
        %v1291 = vsel %vm965, %v1275, 0.0
        %v1292 = vsel %vm966, %v1276, 0.0
        %v1293 = vsel %vm967, %v1277, 0.0
        %v1294 = vsel %vm968, %v1278, 0.0
        %v1295 = vsel %vm969, %v1279, 0.0
        %v1296 = vsel %vm970, %v1280, 0.0
        %v1297 = vpack.c.bf16 %v1282, %v1281
        %v1298 = vpack.c.bf16 %v1284, %v1283
        %v1299 = vpack.c.bf16 %v1286, %v1285
        %v1300 = vpack.c.bf16 %v1288, %v1287
        %v1301 = vpack.c.bf16 %v1290, %v1289
        %v1302 = vpack.c.bf16 %v1292, %v1291
        %v1303 = vpack.c.bf16 %v1294, %v1293
        %v1304 = vpack.c.bf16 %v1296, %v1295
        %v1305 = vld [vmem:[#allocation11] sm:$0xf]
        %v1306 = vld [vmem:[#allocation11 + $0x4] sm:$0xf]
        %v1307 = vld [vmem:[#allocation11 + $0x8] sm:$0xf]
        %v1308 = vld [vmem:[#allocation11 + $0xc] sm:$0xf]
        %v1309 = vld [vmem:[#allocation11 + $0x10] sm:$0xf]
        %v1310 = vld [vmem:[#allocation11 + $0x14] sm:$0xf]
        %v1311 = vld [vmem:[#allocation11 + $0x18] sm:$0xf]
        %v1312 = vld [vmem:[#allocation11 + $0x1c] sm:$0xf]
        %v1313 = vld [vmem:[#allocation11 + $0x20] sm:$0xf]
        %v1314 = vld [vmem:[#allocation11 + $0x24] sm:$0xf]
        %v1315 = vld [vmem:[#allocation11 + $0x28] sm:$0xf]
        %v1316 = vld [vmem:[#allocation11 + $0x2c] sm:$0xf]
        %v1317 = vld [vmem:[#allocation11 + $0x30] sm:$0xf]
        %v1318 = vld [vmem:[#allocation11 + $0x34] sm:$0xf]
        %v1319 = vld [vmem:[#allocation11 + $0x38] sm:$0xf]
        %v1320 = vld [vmem:[#allocation11 + $0x3c] sm:$0xf]
        %v1337 = vunpack.c.l.b16 %v1305
        %v1338 = vunpack.c.l.b16 %v1306
        %v1339 = vunpack.c.l.b16 %v1307
        %v1340 = vunpack.c.l.b16 %v1308
        %v1341 = vunpack.c.l.b16 %v1309
        %v1342 = vunpack.c.l.b16 %v1310
        %v1343 = vunpack.c.l.b16 %v1311
        %v1344 = vunpack.c.l.b16 %v1312
        %v1345 = vunpack.c.l.b16 %v1313
        %v1346 = vunpack.c.l.b16 %v1314
        %v1347 = vunpack.c.l.b16 %v1315
        %v1348 = vunpack.c.l.b16 %v1316
        %v1349 = vunpack.c.l.b16 %v1317
        %v1350 = vunpack.c.l.b16 %v1318
        %v1351 = vunpack.c.l.b16 %v1319
        %v1352 = vunpack.c.l.b16 %v1320
        %v1353 = vpack.c.b16 %v1338, %v1337
        %v1354 = vpack.c.b16 %v1340, %v1339
        %v1355 = vpack.c.b16 %v1342, %v1341
        %v1356 = vpack.c.b16 %v1344, %v1343
        %v1357 = vpack.c.b16 %v1346, %v1345
        %v1358 = vpack.c.b16 %v1348, %v1347
        %v1359 = vpack.c.b16 %v1350, %v1349
        %v1360 = vpack.c.b16 %v1352, %v1351
        %1369 = vmatprep.subr.bf16.mxu0 0
        %1370 = vmatpush1.bf16.msra.mxu0 %v1353
        %1371 = vmatprep.subr.bf16.mxu0 0
        %1372 = vmatpush1.bf16.msra.mxu0 %v1354
        %1373 = vmatprep.subr.bf16.mxu0 0
        %1374 = vmatpush1.bf16.msra.mxu0 %v1355
        %1375 = vmatprep.subr.bf16.mxu0 0
        %1376 = vmatpush1.bf16.msra.mxu0 %v1356
        %1377 = vmatprep.subr.bf16.mxu0 0
        %1378 = vmatpush1.bf16.msra.mxu0 %v1357
        %1379 = vmatprep.subr.bf16.mxu0 0
        %1380 = vmatpush1.bf16.msra.mxu0 %v1358
        %1381 = vmatprep.subr.bf16.mxu0 0
        %1382 = vmatpush1.bf16.msra.mxu0 %v1359
        %1383 = vmatprep.subr.bf16.mxu0 0
        %1384 = vmatpush1.bf16.msra.mxu0 %v1360
        %1385 = vmatprep.subr.bf16.mxu0 0
        %1386 = vmatpush1.bf16.msra.mxu0 0
        %1387 = vmatprep.subr.bf16.mxu0 0
        %1388 = vmatpush1.bf16.msra.mxu0 0
        %1389 = vmatprep.subr.bf16.mxu0 0
        %1390 = vmatpush1.bf16.msra.mxu0 0
        %1391 = vmatprep.subr.bf16.mxu0 0
        %1392 = vmatpush1.bf16.msra.mxu0 0
        %1393 = vmatprep.subr.bf16.mxu0 0
        %1394 = vmatpush1.bf16.msra.mxu0 0
        %1395 = vmatprep.subr.bf16.mxu0 0
        %1396 = vmatpush1.bf16.msra.mxu0 0
        %1397 = vmatprep.subr.bf16.mxu0 0
        %1398 = vmatpush1.bf16.msra.mxu0 0
        %1399 = vmatprep.subr.bf16.mxu0 0
        %1400 = vmatpush1.bf16.msra.mxu0 0
        %1401 = vmatprep.mubr.bf16.mxu0 0
        %1402 = vmatmul.mubr.bf16.gmra.mrb[0].mxu0 %v1297
        %v1403 = vpop.f32.mrb[0].mxu0
        %v1404 = vadd.f32 0.0, %v1403
        %v1405 = vpop.f32.mrb[0].mxu0
        %v1406 = vpop.f32.mrb[0].mxu0
        %v1407 = vadd.f32 0.0, %v1406
        %v1408 = vpop.f32.mrb[0].mxu0
        %1409 = vmatprep.mubr.bf16.mxu0 0
        %1410 = vmatmul.mubr.bf16.gmra.mrb[0].mxu0 %v1298
        %v1411 = vpop.f32.mrb[0].mxu0
        %v1412 = vadd.f32 0.0, %v1411
        %v1413 = vpop.f32.mrb[0].mxu0
        %v1414 = vpop.f32.mrb[0].mxu0
        %v1415 = vadd.f32 0.0, %v1414
        %v1416 = vpop.f32.mrb[0].mxu0
        %1417 = vmatprep.mubr.bf16.mxu0 0
        %1418 = vmatmul.mubr.bf16.gmra.mrb[0].mxu0 %v1299
        %v1419 = vpop.f32.mrb[0].mxu0
        %v1420 = vadd.f32 0.0, %v1419
        %v1421 = vpop.f32.mrb[0].mxu0
        %v1422 = vpop.f32.mrb[0].mxu0
        %v1423 = vadd.f32 0.0, %v1422
        %v1424 = vpop.f32.mrb[0].mxu0
        %1425 = vmatprep.mubr.bf16.mxu0 0
        %1426 = vmatmul.mubr.bf16.gmra.mrb[0].mxu0 %v1300
        %v1427 = vpop.f32.mrb[0].mxu0
        %v1428 = vadd.f32 0.0, %v1427
        %v1429 = vpop.f32.mrb[0].mxu0
        %v1430 = vpop.f32.mrb[0].mxu0
        %v1431 = vadd.f32 0.0, %v1430
        %v1432 = vpop.f32.mrb[0].mxu0
        %1433 = vmatprep.mubr.bf16.mxu0 0
        %1434 = vmatmul.mubr.bf16.gmra.mrb[0].mxu0 %v1301
        %v1435 = vpop.f32.mrb[0].mxu0
        %v1436 = vadd.f32 0.0, %v1435
        %v1437 = vpop.f32.mrb[0].mxu0
        %v1438 = vpop.f32.mrb[0].mxu0
        %v1439 = vadd.f32 0.0, %v1438
        %v1440 = vpop.f32.mrb[0].mxu0
        %1441 = vmatprep.mubr.bf16.mxu0 0
        %1442 = vmatmul.mubr.bf16.gmra.mrb[0].mxu0 %v1302
        %v1443 = vpop.f32.mrb[0].mxu0
        %v1444 = vadd.f32 0.0, %v1443
        %v1445 = vpop.f32.mrb[0].mxu0
        %v1446 = vpop.f32.mrb[0].mxu0
        %v1447 = vadd.f32 0.0, %v1446
        %v1448 = vpop.f32.mrb[0].mxu0
        %1449 = vmatprep.mubr.bf16.mxu0 0
        %1450 = vmatmul.mubr.bf16.gmra.mrb[0].mxu0 %v1303
        %v1451 = vpop.f32.mrb[0].mxu0
        %v1452 = vadd.f32 0.0, %v1451
        %v1453 = vpop.f32.mrb[0].mxu0
        %v1454 = vpop.f32.mrb[0].mxu0
        %v1455 = vadd.f32 0.0, %v1454
        %v1456 = vpop.f32.mrb[0].mxu0
        %1457 = vmatprep.mubr.bf16.mxu0 0
        %1458 = vmatmul.mubr.bf16.gmra.mrb[0].mxu0 %v1304
        %v1459 = vpop.f32.mrb[0].mxu0
        %v1460 = vadd.f32 0.0, %v1459
        %v1461 = vpop.f32.mrb[0].mxu0
        %v1462 = vpop.f32.mrb[0].mxu0
        %v1463 = vadd.f32 0.0, %v1462
        %v1464 = vpop.f32.mrb[0].mxu0
        %1465 = vdwg.mxu0
        %v1466 = vpack.c.bf16 %v1407, %v1404
        %v1467 = vpack.c.bf16 %v1415, %v1412
        %v1468 = vpack.c.bf16 %v1423, %v1420
        %v1469 = vpack.c.bf16 %v1431, %v1428
        %v1470 = vpack.c.bf16 %v1439, %v1436
        %v1471 = vpack.c.bf16 %v1447, %v1444
        %v1472 = vpack.c.bf16 %v1455, %v1452
        %v1473 = vpack.c.bf16 %v1463, %v1460
        %v1474 = vlaneseq
        %v1475 = vshrl.u32 %v1474, 7
        %v1476 = vsub.s32 0, %v1475
        %v1477 = vrot.slane %v539, %v1476
        %1478 = vmatprep.subr.bf16.mxu0 0
        %1479 = vmatpush1.bf16.msra.mxu0 %v1466
        %1480 = vmatprep.subr.bf16.mxu0 0
        %1481 = vmatpush1.bf16.msra.mxu0 %v1467
        %1482 = vmatprep.subr.bf16.mxu0 0
        %1483 = vmatpush1.bf16.msra.mxu0 %v1468
        %1484 = vmatprep.subr.bf16.mxu0 0
        %1485 = vmatpush1.bf16.msra.mxu0 %v1469
        %1486 = vmatprep.subr.bf16.mxu0 0
        %1487 = vmatpush1.bf16.msra.mxu0 %v1470
        %1488 = vmatprep.subr.bf16.mxu0 0
        %1489 = vmatpush1.bf16.msra.mxu0 %v1471
        %1490 = vmatprep.subr.bf16.mxu0 0
        %1491 = vmatpush1.bf16.msra.mxu0 %v1472
        %1492 = vmatprep.subr.bf16.mxu0 0
        %1493 = vmatpush1.bf16.msra.mxu0 %v1473
        %1494 = vmatprep.subr.bf16.mxu0 0
        %1495 = vmatpush1.bf16.msra.mxu0 0
        %1496 = vmatprep.subr.bf16.mxu0 0
        %1497 = vmatpush1.bf16.msra.mxu0 0
        %1498 = vmatprep.subr.bf16.mxu0 0
        %1499 = vmatpush1.bf16.msra.mxu0 0
        %1500 = vmatprep.subr.bf16.mxu0 0
        %1501 = vmatpush1.bf16.msra.mxu0 0
        %1502 = vmatprep.subr.bf16.mxu0 0
        %1503 = vmatpush1.bf16.msra.mxu0 0
        %1504 = vmatprep.subr.bf16.mxu0 0
        %1505 = vmatpush1.bf16.msra.mxu0 0
        %1506 = vmatprep.subr.bf16.mxu0 0
        %1507 = vmatpush1.bf16.msra.mxu0 0
        %1508 = vmatprep.subr.bf16.mxu0 0
        %1509 = vmatpush1.bf16.msra.mxu0 0
        %1510 = vmatprep.mubr.bf16.mxu0 0
        %1511 = vmatmul.mubr.bf16.gmra.mrb[0].mxu0 %v810
        %v1512 = vpop.f32.mrb[0].mxu0
        %v1513 = vadd.f32 %v1477, %v1512
        %v1514 = vpop.f32.mrb[0].mxu0
        %v1515 = vpop.f32.mrb[0].mxu0
        %v1516 = vadd.f32 %v1477, %v1515
        %v1517 = vpop.f32.mrb[0].mxu0
        %1518 = vmatprep.mubr.bf16.mxu0 0
        %1519 = vmatmul.mubr.bf16.gmra.mrb[0].mxu0 %v811
        %v1520 = vpop.f32.mrb[0].mxu0
        %v1521 = vadd.f32 %v1477, %v1520
        %v1522 = vpop.f32.mrb[0].mxu0
        %v1523 = vpop.f32.mrb[0].mxu0
        %v1524 = vadd.f32 %v1477, %v1523
        %v1525 = vpop.f32.mrb[0].mxu0
        %1526 = vmatprep.mubr.bf16.mxu0 0
        %1527 = vmatmul.mubr.bf16.gmra.mrb[0].mxu0 %v812
        %v1528 = vpop.f32.mrb[0].mxu0
        %v1529 = vadd.f32 %v1477, %v1528
        %v1530 = vpop.f32.mrb[0].mxu0
        %v1531 = vpop.f32.mrb[0].mxu0
        %v1532 = vadd.f32 %v1477, %v1531
        %v1533 = vpop.f32.mrb[0].mxu0
        %1534 = vmatprep.mubr.bf16.mxu0 0
        %1535 = vmatmul.mubr.bf16.gmra.mrb[0].mxu0 %v813
        %v1536 = vpop.f32.mrb[0].mxu0
        %v1537 = vadd.f32 %v1477, %v1536
        %v1538 = vpop.f32.mrb[0].mxu0
        %v1539 = vpop.f32.mrb[0].mxu0
        %v1540 = vadd.f32 %v1477, %v1539
        %v1541 = vpop.f32.mrb[0].mxu0
        %1542 = vmatprep.mubr.bf16.mxu0 0
        %1543 = vmatmul.mubr.bf16.gmra.mrb[0].mxu0 %v814
        %v1544 = vpop.f32.mrb[0].mxu0
        %v1545 = vadd.f32 %v1477, %v1544
        %v1546 = vpop.f32.mrb[0].mxu0
        %v1547 = vpop.f32.mrb[0].mxu0
        %v1548 = vadd.f32 %v1477, %v1547
        %v1549 = vpop.f32.mrb[0].mxu0
        %1550 = vmatprep.mubr.bf16.mxu0 0
        %1551 = vmatmul.mubr.bf16.gmra.mrb[0].mxu0 %v815
        %v1552 = vpop.f32.mrb[0].mxu0
        %v1553 = vadd.f32 %v1477, %v1552
        %v1554 = vpop.f32.mrb[0].mxu0
        %v1555 = vpop.f32.mrb[0].mxu0
        %v1556 = vadd.f32 %v1477, %v1555
        %v1557 = vpop.f32.mrb[0].mxu0
        %1558 = vmatprep.mubr.bf16.mxu0 0
        %1559 = vmatmul.mubr.bf16.gmra.mrb[0].mxu0 %v816
        %v1560 = vpop.f32.mrb[0].mxu0
        %v1561 = vadd.f32 %v1477, %v1560
        %v1562 = vpop.f32.mrb[0].mxu0
        %v1563 = vpop.f32.mrb[0].mxu0
        %v1564 = vadd.f32 %v1477, %v1563
        %v1565 = vpop.f32.mrb[0].mxu0
        %1566 = vmatprep.mubr.bf16.mxu0 0
        %1567 = vmatmul.mubr.bf16.gmra.mrb[0].mxu0 %v817
        %v1568 = vpop.f32.mrb[0].mxu0
        %v1569 = vadd.f32 %v1477, %v1568
        %v1570 = vpop.f32.mrb[0].mxu0
        %v1571 = vpop.f32.mrb[0].mxu0
        %v1572 = vadd.f32 %v1477, %v1571
        %v1573 = vpop.f32.mrb[0].mxu0
        %1574 = vdwg.mxu0
        %v1575 = vsel %vm955, %v1513, 0.0
        %v1576 = vsel %vm956, %v1516, 0.0
        %v1577 = vsel %vm957, %v1521, 0.0
        %v1578 = vsel %vm958, %v1524, 0.0
        %v1579 = vsel %vm959, %v1529, 0.0
        %v1580 = vsel %vm960, %v1532, 0.0
        %v1581 = vsel %vm961, %v1537, 0.0
        %v1582 = vsel %vm962, %v1540, 0.0
        %v1583 = vsel %vm963, %v1545, 0.0
        %v1584 = vsel %vm964, %v1548, 0.0
        %v1585 = vsel %vm965, %v1553, 0.0
        %v1586 = vsel %vm966, %v1556, 0.0
        %v1587 = vsel %vm967, %v1561, 0.0
        %v1588 = vsel %vm968, %v1564, 0.0
        %v1589 = vsel %vm969, %v1569, 0.0
        %v1590 = vsel %vm970, %v1572, 0.0
        %v1591 = vld [vmem:[%s397] sm:$0xf]
        %v1592 = vpack.c.bf16 %v1576, %v1575
        %v1593 = vpack.c.bf16 %v1578, %v1577
        %v1594 = vpack.c.bf16 %v1580, %v1579
        %v1595 = vpack.c.bf16 %v1582, %v1581
        %v1596 = vpack.c.bf16 %v1584, %v1583
        %v1597 = vpack.c.bf16 %v1586, %v1585
        %v1598 = vpack.c.bf16 %v1588, %v1587
        %v1599 = vpack.c.bf16 %v1590, %v1589
        %1600 = vmatprep.subr.bf16.mxu0 0
        %1601 = vmatpush1.bf16.msra.mxu0 %v1592
        %1602 = vmatprep.subr.bf16.mxu0 0
        %1603 = vmatpush1.bf16.msra.mxu0 %v1593
        %1604 = vmatprep.subr.bf16.mxu0 0
        %1605 = vmatpush1.bf16.msra.mxu0 %v1594
        %1606 = vmatprep.subr.bf16.mxu0 0
        %1607 = vmatpush1.bf16.msra.mxu0 %v1595
        %1608 = vmatprep.subr.bf16.mxu0 0
        %1609 = vmatpush1.bf16.msra.mxu0 %v1596
        %1610 = vmatprep.subr.bf16.mxu0 0
        %1611 = vmatpush1.bf16.msra.mxu0 %v1597
        %1612 = vmatprep.subr.bf16.mxu0 0
        %1613 = vmatpush1.bf16.msra.mxu0 %v1598
        %1614 = vmatprep.subr.bf16.mxu0 0
        %1615 = vmatpush1.bf16.msra.mxu0 %v1599
        %1616 = vmatprep.subr.bf16.mxu0 0
        %1617 = vmatpush1.bf16.msra.mxu0 0
        %1618 = vmatprep.subr.bf16.mxu0 0
        %1619 = vmatpush1.bf16.msra.mxu0 0
        %1620 = vmatprep.subr.bf16.mxu0 0
        %1621 = vmatpush1.bf16.msra.mxu0 0
        %1622 = vmatprep.subr.bf16.mxu0 0
        %1623 = vmatpush1.bf16.msra.mxu0 0
        %1624 = vmatprep.subr.bf16.mxu0 0
        %1625 = vmatpush1.bf16.msra.mxu0 0
        %1626 = vmatprep.subr.bf16.mxu0 0
        %1627 = vmatpush1.bf16.msra.mxu0 0
        %1628 = vmatprep.subr.bf16.mxu0 0
        %1629 = vmatpush1.bf16.msra.mxu0 0
        %1630 = vmatprep.subr.bf16.mxu0 0
        %1631 = vmatpush1.bf16.msra.mxu0 0
        %1632 = vmatprep.mubr.bf16.mxu0 0
        %1633 = vmatmul.mubr.bf16.gmra.mrb[0].mxu0 %v1591
        %v1634 = vpop.f32.mrb[0].mxu0
        %v1635 = vadd.f32 0.0, %v1634
        %v1636 = vpop.f32.mrb[0].mxu0
        %v1637 = vpop.f32.mrb[0].mxu0
        %v1638 = vpop.f32.mrb[0].mxu0
        %1639 = vdwg.mxu0
        %v1640 = vpack.c.bf16 %v1635, %v1635
        %v1641 = vld [vmem:[#allocation13] sm:$0xf]
        %v1642 = vld [vmem:[#allocation13 + $0x4] sm:$0xf]
        %v1643 = vld [vmem:[#allocation13 + $0x8] sm:$0xf]
        %v1644 = vld [vmem:[#allocation13 + $0xc] sm:$0xf]
        %v1645 = vld [vmem:[#allocation13 + $0x10] sm:$0xf]
        %v1646 = vld [vmem:[#allocation13 + $0x14] sm:$0xf]
        %v1647 = vld [vmem:[#allocation13 + $0x18] sm:$0xf]
        %v1648 = vld [vmem:[#allocation13 + $0x1c] sm:$0xf]
        %v1649 = vld [vmem:[#allocation13 + $0x20] sm:$0xf]
        %v1650 = vld [vmem:[#allocation13 + $0x24] sm:$0xf]
        %v1651 = vld [vmem:[#allocation13 + $0x28] sm:$0xf]
        %v1652 = vld [vmem:[#allocation13 + $0x2c] sm:$0xf]
        %v1653 = vld [vmem:[#allocation13 + $0x30] sm:$0xf]
        %v1654 = vld [vmem:[#allocation13 + $0x34] sm:$0xf]
        %v1655 = vld [vmem:[#allocation13 + $0x38] sm:$0xf]
        %v1656 = vld [vmem:[#allocation13 + $0x3c] sm:$0xf]
        %v1657 = vlaneseq
        %v1658 = vshrl.u32 %v1657, 7
        %v1659 = vsub.s32 0, %v1658
        %v1660 = vrot.slane %v540, %v1659
        %v1677 = vunpack.c.l.b16 %v1641
        %v1678 = vunpack.c.l.b16 %v1642
        %v1679 = vunpack.c.l.b16 %v1643
        %v1680 = vunpack.c.l.b16 %v1644
        %v1681 = vunpack.c.l.b16 %v1645
        %v1682 = vunpack.c.l.b16 %v1646
        %v1683 = vunpack.c.l.b16 %v1647
        %v1684 = vunpack.c.l.b16 %v1648
        %v1685 = vunpack.c.l.b16 %v1649
        %v1686 = vunpack.c.l.b16 %v1650
        %v1687 = vunpack.c.l.b16 %v1651
        %v1688 = vunpack.c.l.b16 %v1652
        %v1689 = vunpack.c.l.b16 %v1653
        %v1690 = vunpack.c.l.b16 %v1654
        %v1691 = vunpack.c.l.b16 %v1655
        %v1692 = vunpack.c.l.b16 %v1656
        %v1693 = vpack.c.b16 %v1678, %v1677
        %v1694 = vpack.c.b16 %v1680, %v1679
        %v1695 = vpack.c.b16 %v1682, %v1681
        %v1696 = vpack.c.b16 %v1684, %v1683
        %v1697 = vpack.c.b16 %v1686, %v1685
        %v1698 = vpack.c.b16 %v1688, %v1687
        %v1699 = vpack.c.b16 %v1690, %v1689
        %v1700 = vpack.c.b16 %v1692, %v1691
        %1709 = vmatprep.subr.bf16.mxu0 0
        %1710 = vmatpush1.bf16.msra.mxu0 %v1693
        %1711 = vmatprep.subr.bf16.mxu0 0
        %1712 = vmatpush1.bf16.msra.mxu0 %v1694
        %1713 = vmatprep.subr.bf16.mxu0 0
        %1714 = vmatpush1.bf16.msra.mxu0 %v1695
        %1715 = vmatprep.subr.bf16.mxu0 0
        %1716 = vmatpush1.bf16.msra.mxu0 %v1696
        %1717 = vmatprep.subr.bf16.mxu0 0
        %1718 = vmatpush1.bf16.msra.mxu0 %v1697
        %1719 = vmatprep.subr.bf16.mxu0 0
        %1720 = vmatpush1.bf16.msra.mxu0 %v1698
        %1721 = vmatprep.subr.bf16.mxu0 0
        %1722 = vmatpush1.bf16.msra.mxu0 %v1699
        %1723 = vmatprep.subr.bf16.mxu0 0
        %1724 = vmatpush1.bf16.msra.mxu0 %v1700
        %1725 = vmatprep.subr.bf16.mxu0 0
        %1726 = vmatpush1.bf16.msra.mxu0 0
        %1727 = vmatprep.subr.bf16.mxu0 0
        %1728 = vmatpush1.bf16.msra.mxu0 0
        %1729 = vmatprep.subr.bf16.mxu0 0
        %1730 = vmatpush1.bf16.msra.mxu0 0
        %1731 = vmatprep.subr.bf16.mxu0 0
        %1732 = vmatpush1.bf16.msra.mxu0 0
        %1733 = vmatprep.subr.bf16.mxu0 0
        %1734 = vmatpush1.bf16.msra.mxu0 0
        %1735 = vmatprep.subr.bf16.mxu0 0
        %1736 = vmatpush1.bf16.msra.mxu0 0
        %1737 = vmatprep.subr.bf16.mxu0 0
        %1738 = vmatpush1.bf16.msra.mxu0 0
        %1739 = vmatprep.subr.bf16.mxu0 0
        %1740 = vmatpush1.bf16.msra.mxu0 0
        %1741 = vmatprep.mubr.bf16.mxu0 0
        %1742 = vmatmul.mubr.bf16.gmra.mrb[0].mxu0 %v1640
        %v1743 = vpop.f32.mrb[0].mxu0
        %v1744 = vadd.f32 %v1660, %v1743
        %v1745 = vpop.f32.mrb[0].mxu0
        %v1746 = vpop.f32.mrb[0].mxu0
        %v1747 = vpop.f32.mrb[0].mxu0
        %1748 = vdwg.mxu0
        %1749 = vst [vmem:[%s455] sm:$0xff] %v1744
        %s1750 = sand.u32 %s221, 1
        %s1751 = scalar_lea.sflag [#allocation4], %s1750
        %s1752 = sand.u32 %s221, 1
        %s1753 = smul.addr %s1752, 8
        %s1754 = scalar_lea.vmem [#allocation14], %s1753
        // Predicated region
        $region81: #{gcn_forward_fused.1} parent=51 // pred_check
          %p1755 = pneg %p231
        $region82: #{gcn_forward_fused.1} parent=51 // pred_check_branch
          %1757 = sbr.rel (%p1755) target = $region84
        $region83: #{gcn_forward_fused.1} parent=51 // pred_region
          %s1759 = ssub.s32 128, 128
          %1760 = vsyncadd %s1751, %s1759
          %s1761 = smul.addr %s30, 128
          %s1762 = scalar_lea.hbm %s8, %s1761
          %s1764 = sshll.u32 %s1754, 4
          %s1765 = int_to_ptr.vmem [resolvable:$true] %s1764
          %1767 = dma.vmem_to_hbm [thread:$0]  %s1765, 128, %s1762, %s1751
        $region84: #{gcn_forward_fused.1} parent=51 // pred_fallthru
          _
      $region52: #{gcn_forward_fused.1} parent=5 // pred_fallthru
        _
      %p1768 = scmp.le.s32.totalorder 2, %s25
      // Predicated region
      $region85: #{gcn_forward_fused.1} parent=5 // pred_check
        %p1769 = pneg %p1768
      $region86: #{gcn_forward_fused.1} parent=5 // pred_check_branch
        %1771 = sbr.rel (%p1769) target = $region88
      $region87: #{gcn_forward_fused.1} parent=5 // pred_region
        %s1772 = ssub.s32 %s25, 2
        // Predicated region
        $region89: #{gcn_forward_fused.1} parent=87 // pred_check
          %p1773 = pneg %p237
        $region90: #{gcn_forward_fused.1} parent=87 // pred_check_branch
          %1775 = sbr.rel (%p1773) target = $region92
        $region91: #{gcn_forward_fused.1} parent=87 // pred_region
          %s1776 = sand.u32 %s222, 1
          %s1777 = scalar_lea.sflag [#allocation4], %s1776
          %s1778 = sand.u32 %s222, 1
          %s1779 = smul.addr %s1778, 8
          %s1780 = scalar_lea.vmem [#allocation14], %s1779
          %1781 = dma.done %s1777, 128
        $region92: #{gcn_forward_fused.1} parent=87 // pred_fallthru
          _
      $region88: #{gcn_forward_fused.1} parent=5 // pred_fallthru
        _
    $region6: #{gcn_forward_fused.1} parent=1 // loop_footer
      %s29 = sadd.s32 1, %s25
    $region7: #{gcn_forward_fused.1} parent=1 // loop_footer_branch
      %24 = sbr.rel target = $region3
    $region8: #{gcn_forward_fused.1} parent=1 // loop_exit
      _
    %1782 = vsyncpa [#allocation3], 1
    %s1783 = scalar_lea.sflag [#allocation3], 1
    %1784 = vsyncpa %s1783, 1
    %1785 = vsyncpa [#allocation6], 1
    %s1786 = scalar_lea.sflag [#allocation6], 1
    %1787 = vsyncpa %s1786, 1
    %1788 = vsyncpa [#allocation9], 1
    %1789 = vsyncpa [#allocation12], 1
    %1790 = vsyncpa [#allocation4], 1
    %s1791 = scalar_lea.sflag [#allocation4], 1
    %1792 = vsyncpa %s1791, 1

</llo_original>
